<compile_context>
chip_gen: v7x
topology: tpu7x:2x2x1
jax: 0.10.0
libtpu: 0.0.40
codegen_flags: <defaults>
</compile_context>

<pallas_src>
import math
import functools

import numpy as np
import jax
import jax.numpy as jnp
from jax.experimental import pallas as pl
from jax.experimental.pallas import tpu as pltpu

# ---------------- tiny synthetic config ----------------
VOCAB = 64
VOCAB_PAD = 128                     # lane-dense logits store (slice to VOCAB outside)
HIDDEN = 32
N_LAYERS = 2
N_HEADS = 2
HEAD_DIM = HIDDEN // N_HEADS        # 16
INNER = 4 * HIDDEN                  # 128
EPS = 1e-5
ALPHA = (2.0 * N_LAYERS) ** 0.5     # GLM deep-norm residual alpha


# ---------------- fused Pallas kernel: whole forward in one invocation ----------------
def _fused_forward_kernel(h_ref, cos_ref, sin_ref, rot_ref, amask_ref,
                          ln1_g_ref, ln1_b_ref, wqkv_ref, bqkv_ref,
                          wo_ref, bo_ref, ln2_g_ref, ln2_b_ref,
                          wh_ref, bh_ref, w4h_ref, b4h_ref,
                          lnf_g_ref, lnf_b_ref, lmh_ref,
                          logits_ref, kv_ref, *, scale):
    def layer_norm(v, g, b):
        mu = jnp.mean(v, axis=-1, keepdims=True)
        var = jnp.mean(jnp.square(v - mu), axis=-1, keepdims=True)
        return (v - mu) * jax.lax.rsqrt(var + EPS) * g + b

    def gelu(v):  # ChatGLM gelu_impl (tanh approximation), f32 elementwise
        return 0.5 * v * (1.0 + jnp.tanh(0.7978845608028654 * v * (1.0 + 0.044715 * v * v)))

    def mxu(a, b):  # bf16 operands into the MXU, f32 accumulate
        return jnp.dot(a.astype(jnp.bfloat16), b.astype(jnp.bfloat16),
                       preferred_element_type=jnp.float32)

    x = h_ref[...]            # [N, H]       token rows in seq-major order (s*B + b)
    cosm = cos_ref[...]       # [N, NH*HD]   rope cos, tiled per head
    sinm = sin_ref[...]       # [N, NH*HD]   rope sin, tiled per head
    rot = rot_ref[...]        # [NH*HD, NH*HD] block-diag rotate_half permutation (bf16)
    amask = amask_ref[...]    # [N, N]       additive mask (-10000, block-diag over batch)

    kv_parts = []
    for l in range(N_LAYERS):
        ln1 = layer_norm(x, ln1_g_ref[l], ln1_b_ref[l])
        # Fused QKV for all heads: one 96-lane-wide MXU push per layer.
        qkv = mxu(ln1, wqkv_ref[l]) + bqkv_ref[l]                  # [N, 3H]
        q = qkv[:, :HIDDEN]
        k = qkv[:, HIDDEN:2 * HIDDEN]
        v = qkv[:, 2 * HIDDEN:]
        # 2D rotary applied once to the fused Q / K (rotate_half == signed permutation).
        q = q * cosm + mxu(q, rot) * sinm
        k = k * cosm + mxu(k, rot) * sinm
        kv_parts.append(k)                                          # post-rope K is cached
        kv_parts.append(v)

        # Attention: per-head [N, N] scores -> additive mask -> stable softmax.
        ctx_heads = []
        for h in range(N_HEADS):
            qh = q[:, h * HEAD_DIM:(h + 1) * HEAD_DIM]
            kh = k[:, h * HEAD_DIM:(h + 1) * HEAD_DIM]
            vh = v[:, h * HEAD_DIM:(h + 1) * HEAD_DIM]
            s = jax.lax.dot_general(qh.astype(jnp.bfloat16), kh.astype(jnp.bfloat16),
                                    (((1,), (1,)), ((), ())),
                                    preferred_element_type=jnp.float32) * scale
            s = s + amask
            s = s - jnp.max(s, axis=-1, keepdims=True)
            p = jnp.exp(s)
            p = p * pl.reciprocal(jnp.sum(p, axis=-1, keepdims=True), approx=True)
            ctx_heads.append(mxu(p, vh))                            # [N, HD]
        ctx = jnp.concatenate(ctx_heads, axis=-1)                   # [N, H]
        attn = mxu(ctx, wo_ref[l]) + bo_ref[l]                      # full out-proj (one push)
        x = ln1 * ALPHA + attn                                      # GLM deep-norm residual

        ln2 = layer_norm(x, ln2_g_ref[l], ln2_b_ref[l])
        hmid = gelu(mxu(ln2, wh_ref[l]) + bh_ref[l])                # [N, INNER]
        mo = mxu(hmid, w4h_ref[l]) + b4h_ref[l]                     # [N, H]
        x = ln2 * ALPHA + mo

    final = layer_norm(x, lnf_g_ref[...], lnf_b_ref[...])
    # Lane-dense (128-wide) logits store; padded vocab columns are sliced off outside.
    logits_ref[...] = mxu(final, lmh_ref[...])
    # Pack K/V of all layers into one [N, L*2*H] = [16, 128] unmasked full-vreg store.
    kv_ref[...] = jnp.concatenate(kv_parts, axis=-1)


# ---------------- JAX glue: rope cache / masks / params ----------------
def rope_cache(d, max_pos):
    inv_freq = 1.0 / (10000.0 ** (jnp.arange(0, d, 2, dtype=jnp.float32) / d))
    t = jnp.arange(max_pos, dtype=jnp.float32)
    freqs = jnp.einsum("s,f->sf", t, inv_freq)
    emb = jnp.concatenate([freqs, freqs], axis=-1)          # [max_pos, d]
    return jnp.cos(emb), jnp.sin(emb)


def _fused_rotate_half_matrix():
    """Block-diagonal R (per head) such that x @ R == rotate_half applied within
    each half of each head's dim (ChatGLM 2D rope)."""
    hd2 = HEAD_DIM // 2
    d = hd2 // 2
    r = np.zeros((hd2, hd2), np.float32)
    for j in range(d):
        r[j + d, j] = -1.0      # out[j]     = -x[j + d]
        r[j, j + d] = 1.0       # out[j + d] =  x[j]
    per_head = np.zeros((HEAD_DIM, HEAD_DIM), np.float32)
    per_head[:hd2, :hd2] = r
    per_head[hd2:, hd2:] = r
    return jnp.asarray(np.kron(np.eye(N_HEADS, dtype=np.float32), per_head))  # [NH*HD, NH*HD]


def build_mask_and_positions(B, S):
    # ChatGLM gMASK prompt: context = first S-1 tokens (bidirectional), last token causal.
    # TODO(synk): real ChatGLM derives context_length from the MASK token position per example.
    context_length = S - 1
    m = jnp.tril(jnp.ones((S, S), dtype=jnp.float32))
    m = m.at[:, :context_length].set(1.0)
    # Tokens are flattened seq-major (row n = s*B + b): build the block-diagonal mask directly.
    seq = jnp.arange(S * B, dtype=jnp.int32) // B
    bat = jnp.arange(S * B, dtype=jnp.int32) % B
    same_batch = bat[:, None] == bat[None, :]
    visible = m[seq[:, None], seq[None, :]] > 0.5
    amask = jnp.where(same_batch & visible, 0.0, -10000.0).astype(jnp.float32)
    pos_sb = jnp.broadcast_to(jnp.arange(S, dtype=jnp.int32)[:, None], (S, B))
    block = jnp.concatenate([jnp.zeros((context_length,), jnp.int32),
                             jnp.arange(S - context_length, dtype=jnp.int32) + 1])
    block_sb = jnp.broadcast_to(block[:, None], (S, B))
    return amask, pos_sb, block_sb


def init_params(key):
    keys = jax.random.split(key, 2 + N_LAYERS)
    params = {
        "wte": 0.02 * jax.random.normal(keys[0], (VOCAB, HIDDEN), jnp.float32),
        "lm_head": 0.02 * jax.random.normal(keys[1], (HIDDEN, VOCAB), jnp.float32),
        "ln_f_g": jnp.ones((HIDDEN,), jnp.float32),
        "ln_f_b": jnp.zeros((HIDDEN,), jnp.float32),
        "layers": [],
    }
    for l in range(N_LAYERS):
        k = jax.random.split(keys[2 + l], 4)
        params["layers"].append(dict(
            ln1_g=jnp.ones((HIDDEN,), jnp.float32), ln1_b=jnp.zeros((HIDDEN,), jnp.float32),
            w_qkv=0.02 * jax.random.normal(k[0], (HIDDEN, 3 * HIDDEN), jnp.float32),
            b_qkv=jnp.zeros((3 * HIDDEN,), jnp.float32),
            w_o=0.02 * jax.random.normal(k[1], (HIDDEN, HIDDEN), jnp.float32),
            b_o=jnp.zeros((HIDDEN,), jnp.float32),
            ln2_g=jnp.ones((HIDDEN,), jnp.float32), ln2_b=jnp.zeros((HIDDEN,), jnp.float32),
            w_h=0.02 * jax.random.normal(k[2], (HIDDEN, INNER), jnp.float32),
            b_h=jnp.zeros((INNER,), jnp.float32),
            w_4h=0.02 * jax.random.normal(k[3], (INNER, HIDDEN), jnp.float32),
            b_4h=jnp.zeros((HIDDEN,), jnp.float32),
        ))
    return params


def prepare_kernel_params(params):
    """One-time host-side repack: stack layers, reorder QKV columns to
    [Q(all heads) | K(all heads) | V(all heads)], pad the LM head to 128 lanes,
    and cast all matmul weights to bf16 (biases / LN params stay f32)."""
    L = len(params["layers"])

    def st(name):
        return jnp.stack([lp[name] for lp in params["layers"]])

    # Reference layout groups columns per head as [q(HD), k(HD), v(HD)];
    # reorder to type-major so q/k/v are contiguous 32-lane slabs.
    w_qkv = st("w_qkv").reshape(L, HIDDEN, N_HEADS, 3, HEAD_DIM)
    w_qkv = w_qkv.transpose(0, 1, 3, 2, 4).reshape(L, HIDDEN, 3 * HIDDEN)
    b_qkv = st("b_qkv").reshape(L, N_HEADS, 3, HEAD_DIM)
    b_qkv = b_qkv.transpose(0, 2, 1, 3).reshape(L, 1, 3 * HIDDEN)

    lm_pad = jnp.zeros((HIDDEN, VOCAB_PAD), jnp.float32).at[:, :VOCAB].set(params["lm_head"])
    bf = lambda a: a.astype(jnp.bfloat16)
    return dict(
        wte=params["wte"],
        lm_head=bf(lm_pad),                                     # [H, 128] (zero bias dropped)
        lnf_g=params["ln_f_g"].reshape(1, HIDDEN),
        lnf_b=params["ln_f_b"].reshape(1, HIDDEN),
        ln1_g=st("ln1_g")[:, None, :], ln1_b=st("ln1_b")[:, None, :],
        ln2_g=st("ln2_g")[:, None, :], ln2_b=st("ln2_b")[:, None, :],
        w_qkv=bf(w_qkv), b_qkv=b_qkv,                           # [L, H, 3H], [L, 1, 3H]
        wo=bf(st("w_o")), bo=st("b_o")[:, None, :],             # [L, H, H],  [L, 1, H]
        wh=bf(st("w_h")), bh=st("b_h")[:, None, :],             # [L, H, 4H], [L, 1, 4H]
        w4h=bf(st("w_4h")), b4h=st("b_4h")[:, None, :],         # [L, 4H, H], [L, 1, H]
        rot=bf(_fused_rotate_half_matrix()),                    # [NH*HD, NH*HD]
    )


def chatmodel_forward(kparams, input_ids):
    """Returns (lm_logits [B,S,V], past_key_values list of (k,v) each [S,B,nh,hd])."""
    B, S = input_ids.shape
    N = B * S
    L = N_LAYERS

    amask, pos_sb, block_sb = build_mask_and_positions(B, S)
    cos, sin = rope_cache(HEAD_DIM // 2, S + 1)
    # Per-token full-head-dim rope multipliers (first half: position ids, second
    # half: block ids — ChatGLM 2D rope), tiled per head -> [N, NH*HD].
    cosm = jnp.concatenate([cos[pos_sb], cos[block_sb]], axis=-1).reshape(N, HEAD_DIM)
    sinm = jnp.concatenate([sin[pos_sb], sin[block_sb]], axis=-1).reshape(N, HEAD_DIM)
    cosm = jnp.tile(cosm, (1, N_HEADS))
    sinm = jnp.tile(sinm, (1, N_HEADS))

    # Embedding gather in seq-major order so the kernel's KV store matches ChatGLM's
    # [S, B, ...] cache convention with no transpose.
    h2d = kparams["wte"][input_ids.T].reshape(N, HIDDEN)

    kern = functools.partial(_fused_forward_kernel, scale=1.0 / math.sqrt(HEAD_DIM))

    # No grid: single invocation, whole arrays resident in VMEM (everything is tiny).
    logits_pad, kv_all = pl.pallas_call(
        kern,
        out_shape=(
            jax.ShapeDtypeStruct((N, VOCAB_PAD), jnp.float32),
            jax.ShapeDtypeStruct((N, L * 2 * HIDDEN), jnp.float32),
        ),
    )(h2d, cosm, sinm, kparams["rot"], amask,
      kparams["ln1_g"], kparams["ln1_b"], kparams["w_qkv"], kparams["b_qkv"],
      kparams["wo"], kparams["bo"], kparams["ln2_g"], kparams["ln2_b"],
      kparams["wh"], kparams["bh"], kparams["w4h"], kparams["b4h"],
      kparams["lnf_g"], kparams["lnf_b"], kparams["lm_head"])

    logits = logits_pad[:, :VOCAB].reshape(S, B, VOCAB).transpose(1, 0, 2)   # [B, S, V]
    # Packed cache [N, L*2*H] -> [S, B, L, 2, NH, HD]: pure reshape + slices, no transpose.
    kv = kv_all.reshape(S, B, L, 2, N_HEADS, HEAD_DIM)
    presents = [(kv[:, :, l, 0], kv[:, :, l, 1]) for l in range(L)]
    # TODO(synk): generation loop / tokenizer / InvalidScoreLogitsProcessor / beam cache
    # reordering are host-side control flow, not kernel work — not implemented here.
    return logits, presents


if __name__ == "__main__":
    key = jax.random.PRNGKey(0)
    pkey, ikey = jax.random.split(key)
    params = init_params(pkey)
    kparams = prepare_kernel_params(params)     # one-time host-side weight repack

    B, S = 2, 8
    input_ids = jax.random.randint(ikey, (B, S), 0, VOCAB, dtype=jnp.int32)

    logits, past = jax.jit(chatmodel_forward)(kparams, input_ids)
    jax.block_until_ready(logits)
    for k_, v_ in past:
        jax.block_until_ready(k_)
        jax.block_until_ready(v_)

    assert logits.shape == (B, S, VOCAB)
    assert logits.dtype == jnp.float32
    assert len(past) == N_LAYERS and past[0][0].shape == (S, B, N_HEADS, HEAD_DIM)
    assert bool(jnp.all(jnp.isfinite(logits)))
    print("KERNEL_OK")
</pallas_src>

<mosaic_0001>
module attributes {stable_mosaic.version = 11 : i64} {
  func.func @_fused_forward_kernel(%arg0: memref<16x32xf32, #tpu.memory_space<vmem>>, %arg1: memref<16x32xf32, #tpu.memory_space<vmem>>, %arg2: memref<16x32xf32, #tpu.memory_space<vmem>>, %arg3: memref<32x32xbf16, #tpu.memory_space<vmem>>, %arg4: memref<16x16xf32, #tpu.memory_space<vmem>>, %arg5: memref<2x1x32xf32, #tpu.memory_space<vmem>>, %arg6: memref<2x1x32xf32, #tpu.memory_space<vmem>>, %arg7: memref<2x32x96xbf16, #tpu.memory_space<vmem>>, %arg8: memref<2x1x96xf32, #tpu.memory_space<vmem>>, %arg9: memref<2x32x32xbf16, #tpu.memory_space<vmem>>, %arg10: memref<2x1x32xf32, #tpu.memory_space<vmem>>, %arg11: memref<2x1x32xf32, #tpu.memory_space<vmem>>, %arg12: memref<2x1x32xf32, #tpu.memory_space<vmem>>, %arg13: memref<2x32x128xbf16, #tpu.memory_space<vmem>>, %arg14: memref<2x1x128xf32, #tpu.memory_space<vmem>>, %arg15: memref<2x128x32xbf16, #tpu.memory_space<vmem>>, %arg16: memref<2x1x32xf32, #tpu.memory_space<vmem>>, %arg17: memref<1x32xf32, #tpu.memory_space<vmem>>, %arg18: memref<1x32xf32, #tpu.memory_space<vmem>>, %arg19: memref<32x128xbf16, #tpu.memory_space<vmem>>, %arg20: memref<16x128xf32, #tpu.memory_space<vmem>>, %arg21: memref<16x128xf32, #tpu.memory_space<vmem>>) attributes {dimension_semantics = [], scalar_prefetch = 0 : i64, scratch_operands = 0 : i64, tpu.core_type = #tpu.core_type<tc>} {
    %c0 = arith.constant 0 : index
    %c0_0 = arith.constant 0 : index
    %0 = vector.load %arg0[%c0, %c0_0] : memref<16x32xf32, #tpu.memory_space<vmem>>, vector<16x32xf32>
    %c0_1 = arith.constant 0 : index
    %c0_2 = arith.constant 0 : index
    %1 = vector.load %arg1[%c0_1, %c0_2] : memref<16x32xf32, #tpu.memory_space<vmem>>, vector<16x32xf32>
    %c0_3 = arith.constant 0 : index
    %c0_4 = arith.constant 0 : index
    %2 = vector.load %arg2[%c0_3, %c0_4] : memref<16x32xf32, #tpu.memory_space<vmem>>, vector<16x32xf32>
    %c0_5 = arith.constant 0 : index
    %c0_6 = arith.constant 0 : index
    %3 = vector.load %arg3[%c0_5, %c0_6] : memref<32x32xbf16, #tpu.memory_space<vmem>>, vector<32x32xbf16>
    %c0_7 = arith.constant 0 : index
    %c0_8 = arith.constant 0 : index
    %4 = vector.load %arg4[%c0_7, %c0_8] : memref<16x16xf32, #tpu.memory_space<vmem>>, vector<16x16xf32>
    %c0_9 = arith.constant 0 : index
    %c0_10 = arith.constant 0 : index
    %c0_11 = arith.constant 0 : index
    %5 = vector.load %arg5[%c0_9, %c0_10, %c0_11] : memref<2x1x32xf32, #tpu.memory_space<vmem>>, vector<1x1x32xf32>
    %6 = vector.shape_cast %5 : vector<1x1x32xf32> to vector<1x32xf32>
    %c0_12 = arith.constant 0 : index
    %c0_13 = arith.constant 0 : index
    %c0_14 = arith.constant 0 : index
    %7 = vector.load %arg6[%c0_12, %c0_13, %c0_14] : memref<2x1x32xf32, #tpu.memory_space<vmem>>, vector<1x1x32xf32>
    %8 = vector.shape_cast %7 : vector<1x1x32xf32> to vector<1x32xf32>
    %cst = arith.constant dense<0.000000e+00> : vector<16xf32>
    %9 = vector.multi_reduction <add>, %0, %cst [1] : vector<16x32xf32> to vector<16xf32>
    %10 = vector.shape_cast %9 : vector<16xf32> to vector<16x1xf32>
    %cst_15 = arith.constant 3.200000e+01 : f32
    %11 = vector.broadcast %cst_15 : f32 to vector<16x1xf32>
    %12 = arith.divf %10, %11 : vector<16x1xf32>
    %13 = vector.broadcast %12 : vector<16x1xf32> to vector<16x32xf32>
    %14 = arith.subf %0, %13 : vector<16x32xf32>
    %15 = arith.mulf %14, %14 : vector<16x32xf32>
    %cst_16 = arith.constant dense<0.000000e+00> : vector<16xf32>
    %16 = vector.multi_reduction <add>, %15, %cst_16 [1] : vector<16x32xf32> to vector<16xf32>
    %17 = vector.shape_cast %16 : vector<16xf32> to vector<16x1xf32>
    %cst_17 = arith.constant 3.200000e+01 : f32
    %18 = vector.broadcast %cst_17 : f32 to vector<16x1xf32>
    %19 = arith.divf %17, %18 : vector<16x1xf32>
    %20 = vector.broadcast %12 : vector<16x1xf32> to vector<16x32xf32>
    %21 = arith.subf %0, %20 : vector<16x32xf32>
    %cst_18 = arith.constant 9.99999974E-6 : f32
    %22 = vector.broadcast %cst_18 : f32 to vector<16x1xf32>
    %23 = arith.addf %19, %22 : vector<16x1xf32>
    %24 = math.rsqrt %23 : vector<16x1xf32>
    %25 = vector.broadcast %24 : vector<16x1xf32> to vector<16x32xf32>
    %26 = arith.mulf %21, %25 : vector<16x32xf32>
    %27 = vector.broadcast %6 : vector<1x32xf32> to vector<16x32xf32>
    %28 = arith.mulf %26, %27 : vector<16x32xf32>
    %29 = vector.broadcast %8 : vector<1x32xf32> to vector<16x32xf32>
    %30 = arith.addf %28, %29 : vector<16x32xf32>
    %c0_19 = arith.constant 0 : index
    %c0_20 = arith.constant 0 : index
    %c0_21 = arith.constant 0 : index
    %31 = vector.load %arg7[%c0_19, %c0_20, %c0_21] : memref<2x32x96xbf16, #tpu.memory_space<vmem>>, vector<1x32x96xbf16>
    %32 = vector.shape_cast %31 : vector<1x32x96xbf16> to vector<32x96xbf16>
    %33 = arith.truncf %30 : vector<16x32xf32> to vector<16x32xbf16>
    %cst_22 = arith.constant dense<0.000000e+00> : vector<16x96xf32>
    %34 = tpu.matmul %33, %32, %cst_22 {dimension_numbers = #tpu.dot_dimension_numbers<[1], [0], [0], [1], [0, 0, 1, 1], [], []>} : vector<16x32xbf16>, vector<32x96xbf16>, vector<16x96xf32> -> vector<16x96xf32>
    %c0_23 = arith.constant 0 : index
    %c0_24 = arith.constant 0 : index
    %c0_25 = arith.constant 0 : index
    %35 = vector.load %arg8[%c0_23, %c0_24, %c0_25] : memref<2x1x96xf32, #tpu.memory_space<vmem>>, vector<1x1x96xf32>
    %36 = vector.shape_cast %35 : vector<1x1x96xf32> to vector<1x96xf32>
    %37 = vector.broadcast %36 : vector<1x96xf32> to vector<16x96xf32>
    %38 = arith.addf %34, %37 : vector<16x96xf32>
    %39 = vector.extract_strided_slice %38 {offsets = [0, 0], sizes = [16, 32], strides = [1, 1]} : vector<16x96xf32> to vector<16x32xf32>
    %40 = vector.extract_strided_slice %38 {offsets = [0, 32], sizes = [16, 32], strides = [1, 1]} : vector<16x96xf32> to vector<16x32xf32>
    %41 = vector.extract_strided_slice %38 {offsets = [0, 64], sizes = [16, 32], strides = [1, 1]} : vector<16x96xf32> to vector<16x32xf32>
    %42 = arith.mulf %39, %1 : vector<16x32xf32>
    %43 = arith.truncf %39 : vector<16x32xf32> to vector<16x32xbf16>
    %cst_26 = arith.constant dense<0.000000e+00> : vector<16x32xf32>
    %44 = tpu.matmul %43, %3, %cst_26 {dimension_numbers = #tpu.dot_dimension_numbers<[1], [0], [0], [1], [0, 0, 1, 1], [], []>} : vector<16x32xbf16>, vector<32x32xbf16>, vector<16x32xf32> -> vector<16x32xf32>
    %45 = arith.mulf %44, %2 : vector<16x32xf32>
    %46 = arith.addf %42, %45 : vector<16x32xf32>
    %47 = arith.mulf %40, %1 : vector<16x32xf32>
    %48 = arith.truncf %40 : vector<16x32xf32> to vector<16x32xbf16>
    %cst_27 = arith.constant dense<0.000000e+00> : vector<16x32xf32>
    %49 = tpu.matmul %48, %3, %cst_27 {dimension_numbers = #tpu.dot_dimension_numbers<[1], [0], [0], [1], [0, 0, 1, 1], [], []>} : vector<16x32xbf16>, vector<32x32xbf16>, vector<16x32xf32> -> vector<16x32xf32>
    %50 = arith.mulf %49, %2 : vector<16x32xf32>
    %51 = arith.addf %47, %50 : vector<16x32xf32>
    %52 = vector.extract_strided_slice %46 {offsets = [0, 0], sizes = [16, 16], strides = [1, 1]} : vector<16x32xf32> to vector<16x16xf32>
    %53 = vector.extract_strided_slice %51 {offsets = [0, 0], sizes = [16, 16], strides = [1, 1]} : vector<16x32xf32> to vector<16x16xf32>
    %54 = vector.extract_strided_slice %41 {offsets = [0, 0], sizes = [16, 16], strides = [1, 1]} : vector<16x32xf32> to vector<16x16xf32>
    %55 = arith.truncf %52 : vector<16x16xf32> to vector<16x16xbf16>
    %56 = arith.truncf %53 : vector<16x16xf32> to vector<16x16xbf16>
    %cst_28 = arith.constant dense<0.000000e+00> : vector<16x16xf32>
    %57 = tpu.matmul %55, %56, %cst_28 {dimension_numbers = #tpu.dot_dimension_numbers<[1], [1], [0], [0], [0, 0, 1, 0], [], []>} : vector<16x16xbf16>, vector<16x16xbf16>, vector<16x16xf32> -> vector<16x16xf32>
    %cst_29 = arith.constant 2.500000e-01 : f32
    %58 = vector.broadcast %cst_29 : f32 to vector<16x16xf32>
    %59 = arith.mulf %57, %58 : vector<16x16xf32>
    %60 = arith.addf %59, %4 : vector<16x16xf32>
    %cst_30 = arith.constant dense<0xFF800000> : vector<16xf32>
    %61 = vector.multi_reduction <maximumf>, %60, %cst_30 [1] : vector<16x16xf32> to vector<16xf32>
    %62 = vector.shape_cast %61 : vector<16xf32> to vector<16x1xf32>
    %63 = vector.broadcast %62 : vector<16x1xf32> to vector<16x16xf32>
    %64 = arith.subf %60, %63 : vector<16x16xf32>
    %65 = math.exp %64 : vector<16x16xf32>
    %cst_31 = arith.constant dense<0.000000e+00> : vector<16xf32>
    %66 = vector.multi_reduction <add>, %65, %cst_31 [1] : vector<16x16xf32> to vector<16xf32>
    %67 = vector.shape_cast %66 : vector<16xf32> to vector<16x1xf32>
    %68 = tpu.reciprocal %67 {approx = true} : vector<16x1xf32> -> vector<16x1xf32>
    %69 = vector.broadcast %68 : vector<16x1xf32> to vector<16x16xf32>
    %70 = arith.mulf %65, %69 : vector<16x16xf32>
    %71 = arith.truncf %70 : vector<16x16xf32> to vector<16x16xbf16>
    %72 = arith.truncf %54 : vector<16x16xf32> to vector<16x16xbf16>
    %cst_32 = arith.constant dense<0.000000e+00> : vector<16x16xf32>
    %73 = tpu.matmul %71, %72, %cst_32 {dimension_numbers = #tpu.dot_dimension_numbers<[1], [0], [0], [1], [0, 0, 1, 1], [], []>} : vector<16x16xbf16>, vector<16x16xbf16>, vector<16x16xf32> -> vector<16x16xf32>
    %74 = vector.extract_strided_slice %46 {offsets = [0, 16], sizes = [16, 16], strides = [1, 1]} : vector<16x32xf32> to vector<16x16xf32>
    %75 = vector.extract_strided_slice %51 {offsets = [0, 16], sizes = [16, 16], strides = [1, 1]} : vector<16x32xf32> to vector<16x16xf32>
    %76 = vector.extract_strided_slice %41 {offsets = [0, 16], sizes = [16, 16], strides = [1, 1]} : vector<16x32xf32> to vector<16x16xf32>
    %77 = arith.truncf %74 : vector<16x16xf32> to vector<16x16xbf16>
    %78 = arith.truncf %75 : vector<16x16xf32> to vector<16x16xbf16>
    %cst_33 = arith.constant dense<0.000000e+00> : vector<16x16xf32>
    %79 = tpu.matmul %77, %78, %cst_33 {dimension_numbers = #tpu.dot_dimension_numbers<[1], [1], [0], [0], [0, 0, 1, 0], [], []>} : vector<16x16xbf16>, vector<16x16xbf16>, vector<16x16xf32> -> vector<16x16xf32>
    %cst_34 = arith.constant 2.500000e-01 : f32
    %80 = vector.broadcast %cst_34 : f32 to vector<16x16xf32>
    %81 = arith.mulf %79, %80 : vector<16x16xf32>
    %82 = arith.addf %81, %4 : vector<16x16xf32>
    %cst_35 = arith.constant dense<0xFF800000> : vector<16xf32>
    %83 = vector.multi_reduction <maximumf>, %82, %cst_35 [1] : vector<16x16xf32> to vector<16xf32>
    %84 = vector.shape_cast %83 : vector<16xf32> to vector<16x1xf32>
    %85 = vector.broadcast %84 : vector<16x1xf32> to vector<16x16xf32>
    %86 = arith.subf %82, %85 : vector<16x16xf32>
    %87 = math.exp %86 : vector<16x16xf32>
    %cst_36 = arith.constant dense<0.000000e+00> : vector<16xf32>
    %88 = vector.multi_reduction <add>, %87, %cst_36 [1] : vector<16x16xf32> to vector<16xf32>
    %89 = vector.shape_cast %88 : vector<16xf32> to vector<16x1xf32>
    %90 = tpu.reciprocal %89 {approx = true} : vector<16x1xf32> -> vector<16x1xf32>
    %91 = vector.broadcast %90 : vector<16x1xf32> to vector<16x16xf32>
    %92 = arith.mulf %87, %91 : vector<16x16xf32>
    %93 = arith.truncf %92 : vector<16x16xf32> to vector<16x16xbf16>
    %94 = arith.truncf %76 : vector<16x16xf32> to vector<16x16xbf16>
    %cst_37 = arith.constant dense<0.000000e+00> : vector<16x16xf32>
    %95 = tpu.matmul %93, %94, %cst_37 {dimension_numbers = #tpu.dot_dimension_numbers<[1], [0], [0], [1], [0, 0, 1, 1], [], []>} : vector<16x16xbf16>, vector<16x16xbf16>, vector<16x16xf32> -> vector<16x16xf32>
    %96 = tpu.concatenate %73, %95 in 1 : vector<16x16xf32>, vector<16x16xf32> -> vector<16x32xf32>
    %c0_38 = arith.constant 0 : index
    %c0_39 = arith.constant 0 : index
    %c0_40 = arith.constant 0 : index
    %97 = vector.load %arg9[%c0_38, %c0_39, %c0_40] : memref<2x32x32xbf16, #tpu.memory_space<vmem>>, vector<1x32x32xbf16>
    %98 = vector.shape_cast %97 : vector<1x32x32xbf16> to vector<32x32xbf16>
    %99 = arith.truncf %96 : vector<16x32xf32> to vector<16x32xbf16>
    %cst_41 = arith.constant dense<0.000000e+00> : vector<16x32xf32>
    %100 = tpu.matmul %99, %98, %cst_41 {dimension_numbers = #tpu.dot_dimension_numbers<[1], [0], [0], [1], [0, 0, 1, 1], [], []>} : vector<16x32xbf16>, vector<32x32xbf16>, vector<16x32xf32> -> vector<16x32xf32>
    %c0_42 = arith.constant 0 : index
    %c0_43 = arith.constant 0 : index
    %c0_44 = arith.constant 0 : index
    %101 = vector.load %arg10[%c0_42, %c0_43, %c0_44] : memref<2x1x32xf32, #tpu.memory_space<vmem>>, vector<1x1x32xf32>
    %102 = vector.shape_cast %101 : vector<1x1x32xf32> to vector<1x32xf32>
    %103 = vector.broadcast %102 : vector<1x32xf32> to vector<16x32xf32>
    %104 = arith.addf %100, %103 : vector<16x32xf32>
    %cst_45 = arith.constant 2.000000e+00 : f32
    %105 = vector.broadcast %cst_45 : f32 to vector<16x32xf32>
    %106 = arith.mulf %30, %105 : vector<16x32xf32>
    %107 = arith.addf %106, %104 : vector<16x32xf32>
    %c0_46 = arith.constant 0 : index
    %c0_47 = arith.constant 0 : index
    %c0_48 = arith.constant 0 : index
    %108 = vector.load %arg11[%c0_46, %c0_47, %c0_48] : memref<2x1x32xf32, #tpu.memory_space<vmem>>, vector<1x1x32xf32>
    %109 = vector.shape_cast %108 : vector<1x1x32xf32> to vector<1x32xf32>
    %c0_49 = arith.constant 0 : index
    %c0_50 = arith.constant 0 : index
    %c0_51 = arith.constant 0 : index
    %110 = vector.load %arg12[%c0_49, %c0_50, %c0_51] : memref<2x1x32xf32, #tpu.memory_space<vmem>>, vector<1x1x32xf32>
    %111 = vector.shape_cast %110 : vector<1x1x32xf32> to vector<1x32xf32>
    %cst_52 = arith.constant dense<0.000000e+00> : vector<16xf32>
    %112 = vector.multi_reduction <add>, %107, %cst_52 [1] : vector<16x32xf32> to vector<16xf32>
    %113 = vector.shape_cast %112 : vector<16xf32> to vector<16x1xf32>
    %cst_53 = arith.constant 3.200000e+01 : f32
    %114 = vector.broadcast %cst_53 : f32 to vector<16x1xf32>
    %115 = arith.divf %113, %114 : vector<16x1xf32>
    %116 = vector.broadcast %115 : vector<16x1xf32> to vector<16x32xf32>
    %117 = arith.subf %107, %116 : vector<16x32xf32>
    %118 = arith.mulf %117, %117 : vector<16x32xf32>
    %cst_54 = arith.constant dense<0.000000e+00> : vector<16xf32>
    %119 = vector.multi_reduction <add>, %118, %cst_54 [1] : vector<16x32xf32> to vector<16xf32>
    %120 = vector.shape_cast %119 : vector<16xf32> to vector<16x1xf32>
    %cst_55 = arith.constant 3.200000e+01 : f32
    %121 = vector.broadcast %cst_55 : f32 to vector<16x1xf32>
    %122 = arith.divf %120, %121 : vector<16x1xf32>
    %123 = vector.broadcast %115 : vector<16x1xf32> to vector<16x32xf32>
    %124 = arith.subf %107, %123 : vector<16x32xf32>
    %cst_56 = arith.constant 9.99999974E-6 : f32
    %125 = vector.broadcast %cst_56 : f32 to vector<16x1xf32>
    %126 = arith.addf %122, %125 : vector<16x1xf32>
    %127 = math.rsqrt %126 : vector<16x1xf32>
    %128 = vector.broadcast %127 : vector<16x1xf32> to vector<16x32xf32>
    %129 = arith.mulf %124, %128 : vector<16x32xf32>
    %130 = vector.broadcast %109 : vector<1x32xf32> to vector<16x32xf32>
    %131 = arith.mulf %129, %130 : vector<16x32xf32>
    %132 = vector.broadcast %111 : vector<1x32xf32> to vector<16x32xf32>
    %133 = arith.addf %131, %132 : vector<16x32xf32>
    %c0_57 = arith.constant 0 : index
    %c0_58 = arith.constant 0 : index
    %c0_59 = arith.constant 0 : index
    %134 = vector.load %arg13[%c0_57, %c0_58, %c0_59] : memref<2x32x128xbf16, #tpu.memory_space<vmem>>, vector<1x32x128xbf16>
    %135 = vector.shape_cast %134 : vector<1x32x128xbf16> to vector<32x128xbf16>
    %136 = arith.truncf %133 : vector<16x32xf32> to vector<16x32xbf16>
    %cst_60 = arith.constant dense<0.000000e+00> : vector<16x128xf32>
    %137 = tpu.matmul %136, %135, %cst_60 {dimension_numbers = #tpu.dot_dimension_numbers<[1], [0], [0], [1], [0, 0, 1, 1], [], []>} : vector<16x32xbf16>, vector<32x128xbf16>, vector<16x128xf32> -> vector<16x128xf32>
    %c0_61 = arith.constant 0 : index
    %c0_62 = arith.constant 0 : index
    %c0_63 = arith.constant 0 : index
    %138 = vector.load %arg14[%c0_61, %c0_62, %c0_63] : memref<2x1x128xf32, #tpu.memory_space<vmem>>, vector<1x1x128xf32>
    %139 = vector.shape_cast %138 : vector<1x1x128xf32> to vector<1x128xf32>
    %140 = vector.broadcast %139 : vector<1x128xf32> to vector<16x128xf32>
    %141 = arith.addf %137, %140 : vector<16x128xf32>
    %cst_64 = arith.constant 5.000000e-01 : f32
    %142 = vector.broadcast %cst_64 : f32 to vector<16x128xf32>
    %143 = arith.mulf %142, %141 : vector<16x128xf32>
    %cst_65 = arith.constant 0.797884583 : f32
    %144 = vector.broadcast %cst_65 : f32 to vector<16x128xf32>
    %145 = arith.mulf %144, %141 : vector<16x128xf32>
    %cst_66 = arith.constant 4.471500e-02 : f32
    %146 = vector.broadcast %cst_66 : f32 to vector<16x128xf32>
    %147 = arith.mulf %146, %141 : vector<16x128xf32>
    %148 = arith.mulf %147, %141 : vector<16x128xf32>
    %cst_67 = arith.constant 1.000000e+00 : f32
    %149 = vector.broadcast %cst_67 : f32 to vector<16x128xf32>
    %150 = arith.addf %149, %148 : vector<16x128xf32>
    %151 = arith.mulf %145, %150 : vector<16x128xf32>
    %152 = math.tanh %151 : vector<16x128xf32>
    %cst_68 = arith.constant 1.000000e+00 : f32
    %153 = vector.broadcast %cst_68 : f32 to vector<16x128xf32>
    %154 = arith.addf %153, %152 : vector<16x128xf32>
    %155 = arith.mulf %143, %154 : vector<16x128xf32>
    %c0_69 = arith.constant 0 : index
    %c0_70 = arith.constant 0 : index
    %c0_71 = arith.constant 0 : index
    %156 = vector.load %arg15[%c0_69, %c0_70, %c0_71] : memref<2x128x32xbf16, #tpu.memory_space<vmem>>, vector<1x128x32xbf16>
    %157 = vector.shape_cast %156 : vector<1x128x32xbf16> to vector<128x32xbf16>
    %158 = arith.truncf %155 : vector<16x128xf32> to vector<16x128xbf16>
    %cst_72 = arith.constant dense<0.000000e+00> : vector<16x32xf32>
    %159 = tpu.matmul %158, %157, %cst_72 {dimension_numbers = #tpu.dot_dimension_numbers<[1], [0], [0], [1], [0, 0, 1, 1], [], []>} : vector<16x128xbf16>, vector<128x32xbf16>, vector<16x32xf32> -> vector<16x32xf32>
    %c0_73 = arith.constant 0 : index
    %c0_74 = arith.constant 0 : index
    %c0_75 = arith.constant 0 : index
    %160 = vector.load %arg16[%c0_73, %c0_74, %c0_75] : memref<2x1x32xf32, #tpu.memory_space<vmem>>, vector<1x1x32xf32>
    %161 = vector.shape_cast %160 : vector<1x1x32xf32> to vector<1x32xf32>
    %162 = vector.broadcast %161 : vector<1x32xf32> to vector<16x32xf32>
    %163 = arith.addf %159, %162 : vector<16x32xf32>
    %cst_76 = arith.constant 2.000000e+00 : f32
    %164 = vector.broadcast %cst_76 : f32 to vector<16x32xf32>
    %165 = arith.mulf %133, %164 : vector<16x32xf32>
    %166 = arith.addf %165, %163 : vector<16x32xf32>
    %c1 = arith.constant 1 : index
    %c0_77 = arith.constant 0 : index
    %c0_78 = arith.constant 0 : index
    %167 = vector.load %arg5[%c1, %c0_77, %c0_78] : memref<2x1x32xf32, #tpu.memory_space<vmem>>, vector<1x1x32xf32>
    %168 = vector.shape_cast %167 : vector<1x1x32xf32> to vector<1x32xf32>
    %c1_79 = arith.constant 1 : index
    %c0_80 = arith.constant 0 : index
    %c0_81 = arith.constant 0 : index
    %169 = vector.load %arg6[%c1_79, %c0_80, %c0_81] : memref<2x1x32xf32, #tpu.memory_space<vmem>>, vector<1x1x32xf32>
    %170 = vector.shape_cast %169 : vector<1x1x32xf32> to vector<1x32xf32>
    %cst_82 = arith.constant dense<0.000000e+00> : vector<16xf32>
    %171 = vector.multi_reduction <add>, %166, %cst_82 [1] : vector<16x32xf32> to vector<16xf32>
    %172 = vector.shape_cast %171 : vector<16xf32> to vector<16x1xf32>
    %cst_83 = arith.constant 3.200000e+01 : f32
    %173 = vector.broadcast %cst_83 : f32 to vector<16x1xf32>
    %174 = arith.divf %172, %173 : vector<16x1xf32>
    %175 = vector.broadcast %174 : vector<16x1xf32> to vector<16x32xf32>
    %176 = arith.subf %166, %175 : vector<16x32xf32>
    %177 = arith.mulf %176, %176 : vector<16x32xf32>
    %cst_84 = arith.constant dense<0.000000e+00> : vector<16xf32>
    %178 = vector.multi_reduction <add>, %177, %cst_84 [1] : vector<16x32xf32> to vector<16xf32>
    %179 = vector.shape_cast %178 : vector<16xf32> to vector<16x1xf32>
    %cst_85 = arith.constant 3.200000e+01 : f32
    %180 = vector.broadcast %cst_85 : f32 to vector<16x1xf32>
    %181 = arith.divf %179, %180 : vector<16x1xf32>
    %182 = vector.broadcast %174 : vector<16x1xf32> to vector<16x32xf32>
    %183 = arith.subf %166, %182 : vector<16x32xf32>
    %cst_86 = arith.constant 9.99999974E-6 : f32
    %184 = vector.broadcast %cst_86 : f32 to vector<16x1xf32>
    %185 = arith.addf %181, %184 : vector<16x1xf32>
    %186 = math.rsqrt %185 : vector<16x1xf32>
    %187 = vector.broadcast %186 : vector<16x1xf32> to vector<16x32xf32>
    %188 = arith.mulf %183, %187 : vector<16x32xf32>
    %189 = vector.broadcast %168 : vector<1x32xf32> to vector<16x32xf32>
    %190 = arith.mulf %188, %189 : vector<16x32xf32>
    %191 = vector.broadcast %170 : vector<1x32xf32> to vector<16x32xf32>
    %192 = arith.addf %190, %191 : vector<16x32xf32>
    %c1_87 = arith.constant 1 : index
    %c0_88 = arith.constant 0 : index
    %c0_89 = arith.constant 0 : index
    %193 = vector.load %arg7[%c1_87, %c0_88, %c0_89] : memref<2x32x96xbf16, #tpu.memory_space<vmem>>, vector<1x32x96xbf16>
    %194 = vector.shape_cast %193 : vector<1x32x96xbf16> to vector<32x96xbf16>
    %195 = arith.truncf %192 : vector<16x32xf32> to vector<16x32xbf16>
    %cst_90 = arith.constant dense<0.000000e+00> : vector<16x96xf32>
    %196 = tpu.matmul %195, %194, %cst_90 {dimension_numbers = #tpu.dot_dimension_numbers<[1], [0], [0], [1], [0, 0, 1, 1], [], []>} : vector<16x32xbf16>, vector<32x96xbf16>, vector<16x96xf32> -> vector<16x96xf32>
    %c1_91 = arith.constant 1 : index
    %c0_92 = arith.constant 0 : index
    %c0_93 = arith.constant 0 : index
    %197 = vector.load %arg8[%c1_91, %c0_92, %c0_93] : memref<2x1x96xf32, #tpu.memory_space<vmem>>, vector<1x1x96xf32>
    %198 = vector.shape_cast %197 : vector<1x1x96xf32> to vector<1x96xf32>
    %199 = vector.broadcast %198 : vector<1x96xf32> to vector<16x96xf32>
    %200 = arith.addf %196, %199 : vector<16x96xf32>
    %201 = vector.extract_strided_slice %200 {offsets = [0, 0], sizes = [16, 32], strides = [1, 1]} : vector<16x96xf32> to vector<16x32xf32>
    %202 = vector.extract_strided_slice %200 {offsets = [0, 32], sizes = [16, 32], strides = [1, 1]} : vector<16x96xf32> to vector<16x32xf32>
    %203 = vector.extract_strided_slice %200 {offsets = [0, 64], sizes = [16, 32], strides = [1, 1]} : vector<16x96xf32> to vector<16x32xf32>
    %204 = arith.mulf %201, %1 : vector<16x32xf32>
    %205 = arith.truncf %201 : vector<16x32xf32> to vector<16x32xbf16>
    %cst_94 = arith.constant dense<0.000000e+00> : vector<16x32xf32>
    %206 = tpu.matmul %205, %3, %cst_94 {dimension_numbers = #tpu.dot_dimension_numbers<[1], [0], [0], [1], [0, 0, 1, 1], [], []>} : vector<16x32xbf16>, vector<32x32xbf16>, vector<16x32xf32> -> vector<16x32xf32>
    %207 = arith.mulf %206, %2 : vector<16x32xf32>
    %208 = arith.addf %204, %207 : vector<16x32xf32>
    %209 = arith.mulf %202, %1 : vector<16x32xf32>
    %210 = arith.truncf %202 : vector<16x32xf32> to vector<16x32xbf16>
    %cst_95 = arith.constant dense<0.000000e+00> : vector<16x32xf32>
    %211 = tpu.matmul %210, %3, %cst_95 {dimension_numbers = #tpu.dot_dimension_numbers<[1], [0], [0], [1], [0, 0, 1, 1], [], []>} : vector<16x32xbf16>, vector<32x32xbf16>, vector<16x32xf32> -> vector<16x32xf32>
    %212 = arith.mulf %211, %2 : vector<16x32xf32>
    %213 = arith.addf %209, %212 : vector<16x32xf32>
    %214 = vector.extract_strided_slice %208 {offsets = [0, 0], sizes = [16, 16], strides = [1, 1]} : vector<16x32xf32> to vector<16x16xf32>
    %215 = vector.extract_strided_slice %213 {offsets = [0, 0], sizes = [16, 16], strides = [1, 1]} : vector<16x32xf32> to vector<16x16xf32>
    %216 = vector.extract_strided_slice %203 {offsets = [0, 0], sizes = [16, 16], strides = [1, 1]} : vector<16x32xf32> to vector<16x16xf32>
    %217 = arith.truncf %214 : vector<16x16xf32> to vector<16x16xbf16>
    %218 = arith.truncf %215 : vector<16x16xf32> to vector<16x16xbf16>
    %cst_96 = arith.constant dense<0.000000e+00> : vector<16x16xf32>
    %219 = tpu.matmul %217, %218, %cst_96 {dimension_numbers = #tpu.dot_dimension_numbers<[1], [1], [0], [0], [0, 0, 1, 0], [], []>} : vector<16x16xbf16>, vector<16x16xbf16>, vector<16x16xf32> -> vector<16x16xf32>
    %cst_97 = arith.constant 2.500000e-01 : f32
    %220 = vector.broadcast %cst_97 : f32 to vector<16x16xf32>
    %221 = arith.mulf %219, %220 : vector<16x16xf32>
    %222 = arith.addf %221, %4 : vector<16x16xf32>
    %cst_98 = arith.constant dense<0xFF800000> : vector<16xf32>
    %223 = vector.multi_reduction <maximumf>, %222, %cst_98 [1] : vector<16x16xf32> to vector<16xf32>
    %224 = vector.shape_cast %223 : vector<16xf32> to vector<16x1xf32>
    %225 = vector.broadcast %224 : vector<16x1xf32> to vector<16x16xf32>
    %226 = arith.subf %222, %225 : vector<16x16xf32>
    %227 = math.exp %226 : vector<16x16xf32>
    %cst_99 = arith.constant dense<0.000000e+00> : vector<16xf32>
    %228 = vector.multi_reduction <add>, %227, %cst_99 [1] : vector<16x16xf32> to vector<16xf32>
    %229 = vector.shape_cast %228 : vector<16xf32> to vector<16x1xf32>
    %230 = tpu.reciprocal %229 {approx = true} : vector<16x1xf32> -> vector<16x1xf32>
    %231 = vector.broadcast %230 : vector<16x1xf32> to vector<16x16xf32>
    %232 = arith.mulf %227, %231 : vector<16x16xf32>
    %233 = arith.truncf %232 : vector<16x16xf32> to vector<16x16xbf16>
    %234 = arith.truncf %216 : vector<16x16xf32> to vector<16x16xbf16>
    %cst_100 = arith.constant dense<0.000000e+00> : vector<16x16xf32>
    %235 = tpu.matmul %233, %234, %cst_100 {dimension_numbers = #tpu.dot_dimension_numbers<[1], [0], [0], [1], [0, 0, 1, 1], [], []>} : vector<16x16xbf16>, vector<16x16xbf16>, vector<16x16xf32> -> vector<16x16xf32>
    %236 = vector.extract_strided_slice %208 {offsets = [0, 16], sizes = [16, 16], strides = [1, 1]} : vector<16x32xf32> to vector<16x16xf32>
    %237 = vector.extract_strided_slice %213 {offsets = [0, 16], sizes = [16, 16], strides = [1, 1]} : vector<16x32xf32> to vector<16x16xf32>
    %238 = vector.extract_strided_slice %203 {offsets = [0, 16], sizes = [16, 16], strides = [1, 1]} : vector<16x32xf32> to vector<16x16xf32>
    %239 = arith.truncf %236 : vector<16x16xf32> to vector<16x16xbf16>
    %240 = arith.truncf %237 : vector<16x16xf32> to vector<16x16xbf16>
    %cst_101 = arith.constant dense<0.000000e+00> : vector<16x16xf32>
    %241 = tpu.matmul %239, %240, %cst_101 {dimension_numbers = #tpu.dot_dimension_numbers<[1], [1], [0], [0], [0, 0, 1, 0], [], []>} : vector<16x16xbf16>, vector<16x16xbf16>, vector<16x16xf32> -> vector<16x16xf32>
    %cst_102 = arith.constant 2.500000e-01 : f32
    %242 = vector.broadcast %cst_102 : f32 to vector<16x16xf32>
    %243 = arith.mulf %241, %242 : vector<16x16xf32>
    %244 = arith.addf %243, %4 : vector<16x16xf32>
    %cst_103 = arith.constant dense<0xFF800000> : vector<16xf32>
    %245 = vector.multi_reduction <maximumf>, %244, %cst_103 [1] : vector<16x16xf32> to vector<16xf32>
    %246 = vector.shape_cast %245 : vector<16xf32> to vector<16x1xf32>
    %247 = vector.broadcast %246 : vector<16x1xf32> to vector<16x16xf32>
    %248 = arith.subf %244, %247 : vector<16x16xf32>
    %249 = math.exp %248 : vector<16x16xf32>
    %cst_104 = arith.constant dense<0.000000e+00> : vector<16xf32>
    %250 = vector.multi_reduction <add>, %249, %cst_104 [1] : vector<16x16xf32> to vector<16xf32>
    %251 = vector.shape_cast %250 : vector<16xf32> to vector<16x1xf32>
    %252 = tpu.reciprocal %251 {approx = true} : vector<16x1xf32> -> vector<16x1xf32>
    %253 = vector.broadcast %252 : vector<16x1xf32> to vector<16x16xf32>
    %254 = arith.mulf %249, %253 : vector<16x16xf32>
    %255 = arith.truncf %254 : vector<16x16xf32> to vector<16x16xbf16>
    %256 = arith.truncf %238 : vector<16x16xf32> to vector<16x16xbf16>
    %cst_105 = arith.constant dense<0.000000e+00> : vector<16x16xf32>
    %257 = tpu.matmul %255, %256, %cst_105 {dimension_numbers = #tpu.dot_dimension_numbers<[1], [0], [0], [1], [0, 0, 1, 1], [], []>} : vector<16x16xbf16>, vector<16x16xbf16>, vector<16x16xf32> -> vector<16x16xf32>
    %258 = tpu.concatenate %235, %257 in 1 : vector<16x16xf32>, vector<16x16xf32> -> vector<16x32xf32>
    %c1_106 = arith.constant 1 : index
    %c0_107 = arith.constant 0 : index
    %c0_108 = arith.constant 0 : index
    %259 = vector.load %arg9[%c1_106, %c0_107, %c0_108] : memref<2x32x32xbf16, #tpu.memory_space<vmem>>, vector<1x32x32xbf16>
    %260 = vector.shape_cast %259 : vector<1x32x32xbf16> to vector<32x32xbf16>
    %261 = arith.truncf %258 : vector<16x32xf32> to vector<16x32xbf16>
    %cst_109 = arith.constant dense<0.000000e+00> : vector<16x32xf32>
    %262 = tpu.matmul %261, %260, %cst_109 {dimension_numbers = #tpu.dot_dimension_numbers<[1], [0], [0], [1], [0, 0, 1, 1], [], []>} : vector<16x32xbf16>, vector<32x32xbf16>, vector<16x32xf32> -> vector<16x32xf32>
    %c1_110 = arith.constant 1 : index
    %c0_111 = arith.constant 0 : index
    %c0_112 = arith.constant 0 : index
    %263 = vector.load %arg10[%c1_110, %c0_111, %c0_112] : memref<2x1x32xf32, #tpu.memory_space<vmem>>, vector<1x1x32xf32>
    %264 = vector.shape_cast %263 : vector<1x1x32xf32> to vector<1x32xf32>
    %265 = vector.broadcast %264 : vector<1x32xf32> to vector<16x32xf32>
    %266 = arith.addf %262, %265 : vector<16x32xf32>
    %cst_113 = arith.constant 2.000000e+00 : f32
    %267 = vector.broadcast %cst_113 : f32 to vector<16x32xf32>
    %268 = arith.mulf %192, %267 : vector<16x32xf32>
    %269 = arith.addf %268, %266 : vector<16x32xf32>
    %c1_114 = arith.constant 1 : index
    %c0_115 = arith.constant 0 : index
    %c0_116 = arith.constant 0 : index
    %270 = vector.load %arg11[%c1_114, %c0_115, %c0_116] : memref<2x1x32xf32, #tpu.memory_space<vmem>>, vector<1x1x32xf32>
    %271 = vector.shape_cast %270 : vector<1x1x32xf32> to vector<1x32xf32>
    %c1_117 = arith.constant 1 : index
    %c0_118 = arith.constant 0 : index
    %c0_119 = arith.constant 0 : index
    %272 = vector.load %arg12[%c1_117, %c0_118, %c0_119] : memref<2x1x32xf32, #tpu.memory_space<vmem>>, vector<1x1x32xf32>
    %273 = vector.shape_cast %272 : vector<1x1x32xf32> to vector<1x32xf32>
    %cst_120 = arith.constant dense<0.000000e+00> : vector<16xf32>
    %274 = vector.multi_reduction <add>, %269, %cst_120 [1] : vector<16x32xf32> to vector<16xf32>
    %275 = vector.shape_cast %274 : vector<16xf32> to vector<16x1xf32>
    %cst_121 = arith.constant 3.200000e+01 : f32
    %276 = vector.broadcast %cst_121 : f32 to vector<16x1xf32>
    %277 = arith.divf %275, %276 : vector<16x1xf32>
    %278 = vector.broadcast %277 : vector<16x1xf32> to vector<16x32xf32>
    %279 = arith.subf %269, %278 : vector<16x32xf32>
    %280 = arith.mulf %279, %279 : vector<16x32xf32>
    %cst_122 = arith.constant dense<0.000000e+00> : vector<16xf32>
    %281 = vector.multi_reduction <add>, %280, %cst_122 [1] : vector<16x32xf32> to vector<16xf32>
    %282 = vector.shape_cast %281 : vector<16xf32> to vector<16x1xf32>
    %cst_123 = arith.constant 3.200000e+01 : f32
    %283 = vector.broadcast %cst_123 : f32 to vector<16x1xf32>
    %284 = arith.divf %282, %283 : vector<16x1xf32>
    %285 = vector.broadcast %277 : vector<16x1xf32> to vector<16x32xf32>
    %286 = arith.subf %269, %285 : vector<16x32xf32>
    %cst_124 = arith.constant 9.99999974E-6 : f32
    %287 = vector.broadcast %cst_124 : f32 to vector<16x1xf32>
    %288 = arith.addf %284, %287 : vector<16x1xf32>
    %289 = math.rsqrt %288 : vector<16x1xf32>
    %290 = vector.broadcast %289 : vector<16x1xf32> to vector<16x32xf32>
    %291 = arith.mulf %286, %290 : vector<16x32xf32>
    %292 = vector.broadcast %271 : vector<1x32xf32> to vector<16x32xf32>
    %293 = arith.mulf %291, %292 : vector<16x32xf32>
    %294 = vector.broadcast %273 : vector<1x32xf32> to vector<16x32xf32>
    %295 = arith.addf %293, %294 : vector<16x32xf32>
    %c1_125 = arith.constant 1 : index
    %c0_126 = arith.constant 0 : index
    %c0_127 = arith.constant 0 : index
    %296 = vector.load %arg13[%c1_125, %c0_126, %c0_127] : memref<2x32x128xbf16, #tpu.memory_space<vmem>>, vector<1x32x128xbf16>
    %297 = vector.shape_cast %296 : vector<1x32x128xbf16> to vector<32x128xbf16>
    %298 = arith.truncf %295 : vector<16x32xf32> to vector<16x32xbf16>
    %cst_128 = arith.constant dense<0.000000e+00> : vector<16x128xf32>
    %299 = tpu.matmul %298, %297, %cst_128 {dimension_numbers = #tpu.dot_dimension_numbers<[1], [0], [0], [1], [0, 0, 1, 1], [], []>} : vector<16x32xbf16>, vector<32x128xbf16>, vector<16x128xf32> -> vector<16x128xf32>
    %c1_129 = arith.constant 1 : index
    %c0_130 = arith.constant 0 : index
    %c0_131 = arith.constant 0 : index
    %300 = vector.load %arg14[%c1_129, %c0_130, %c0_131] : memref<2x1x128xf32, #tpu.memory_space<vmem>>, vector<1x1x128xf32>
    %301 = vector.shape_cast %300 : vector<1x1x128xf32> to vector<1x128xf32>
    %302 = vector.broadcast %301 : vector<1x128xf32> to vector<16x128xf32>
    %303 = arith.addf %299, %302 : vector<16x128xf32>
    %cst_132 = arith.constant 5.000000e-01 : f32
    %304 = vector.broadcast %cst_132 : f32 to vector<16x128xf32>
    %305 = arith.mulf %304, %303 : vector<16x128xf32>
    %cst_133 = arith.constant 0.797884583 : f32
    %306 = vector.broadcast %cst_133 : f32 to vector<16x128xf32>
    %307 = arith.mulf %306, %303 : vector<16x128xf32>
    %cst_134 = arith.constant 4.471500e-02 : f32
    %308 = vector.broadcast %cst_134 : f32 to vector<16x128xf32>
    %309 = arith.mulf %308, %303 : vector<16x128xf32>
    %310 = arith.mulf %309, %303 : vector<16x128xf32>
    %cst_135 = arith.constant 1.000000e+00 : f32
    %311 = vector.broadcast %cst_135 : f32 to vector<16x128xf32>
    %312 = arith.addf %311, %310 : vector<16x128xf32>
    %313 = arith.mulf %307, %312 : vector<16x128xf32>
    %314 = math.tanh %313 : vector<16x128xf32>
    %cst_136 = arith.constant 1.000000e+00 : f32
    %315 = vector.broadcast %cst_136 : f32 to vector<16x128xf32>
    %316 = arith.addf %315, %314 : vector<16x128xf32>
    %317 = arith.mulf %305, %316 : vector<16x128xf32>
    %c1_137 = arith.constant 1 : index
    %c0_138 = arith.constant 0 : index
    %c0_139 = arith.constant 0 : index
    %318 = vector.load %arg15[%c1_137, %c0_138, %c0_139] : memref<2x128x32xbf16, #tpu.memory_space<vmem>>, vector<1x128x32xbf16>
    %319 = vector.shape_cast %318 : vector<1x128x32xbf16> to vector<128x32xbf16>
    %320 = arith.truncf %317 : vector<16x128xf32> to vector<16x128xbf16>
    %cst_140 = arith.constant dense<0.000000e+00> : vector<16x32xf32>
    %321 = tpu.matmul %320, %319, %cst_140 {dimension_numbers = #tpu.dot_dimension_numbers<[1], [0], [0], [1], [0, 0, 1, 1], [], []>} : vector<16x128xbf16>, vector<128x32xbf16>, vector<16x32xf32> -> vector<16x32xf32>
    %c1_141 = arith.constant 1 : index
    %c0_142 = arith.constant 0 : index
    %c0_143 = arith.constant 0 : index
    %322 = vector.load %arg16[%c1_141, %c0_142, %c0_143] : memref<2x1x32xf32, #tpu.memory_space<vmem>>, vector<1x1x32xf32>
    %323 = vector.shape_cast %322 : vector<1x1x32xf32> to vector<1x32xf32>
    %324 = vector.broadcast %323 : vector<1x32xf32> to vector<16x32xf32>
    %325 = arith.addf %321, %324 : vector<16x32xf32>
    %cst_144 = arith.constant 2.000000e+00 : f32
    %326 = vector.broadcast %cst_144 : f32 to vector<16x32xf32>
    %327 = arith.mulf %295, %326 : vector<16x32xf32>
    %328 = arith.addf %327, %325 : vector<16x32xf32>
    %c0_145 = arith.constant 0 : index
    %c0_146 = arith.constant 0 : index
    %329 = vector.load %arg17[%c0_145, %c0_146] : memref<1x32xf32, #tpu.memory_space<vmem>>, vector<1x32xf32>
    %c0_147 = arith.constant 0 : index
    %c0_148 = arith.constant 0 : index
    %330 = vector.load %arg18[%c0_147, %c0_148] : memref<1x32xf32, #tpu.memory_space<vmem>>, vector<1x32xf32>
    %cst_149 = arith.constant dense<0.000000e+00> : vector<16xf32>
    %331 = vector.multi_reduction <add>, %328, %cst_149 [1] : vector<16x32xf32> to vector<16xf32>
    %332 = vector.shape_cast %331 : vector<16xf32> to vector<16x1xf32>
    %cst_150 = arith.constant 3.200000e+01 : f32
    %333 = vector.broadcast %cst_150 : f32 to vector<16x1xf32>
    %334 = arith.divf %332, %333 : vector<16x1xf32>
    %335 = vector.broadcast %334 : vector<16x1xf32> to vector<16x32xf32>
    %336 = arith.subf %328, %335 : vector<16x32xf32>
    %337 = arith.mulf %336, %336 : vector<16x32xf32>
    %cst_151 = arith.constant dense<0.000000e+00> : vector<16xf32>
    %338 = vector.multi_reduction <add>, %337, %cst_151 [1] : vector<16x32xf32> to vector<16xf32>
    %339 = vector.shape_cast %338 : vector<16xf32> to vector<16x1xf32>
    %cst_152 = arith.constant 3.200000e+01 : f32
    %340 = vector.broadcast %cst_152 : f32 to vector<16x1xf32>
    %341 = arith.divf %339, %340 : vector<16x1xf32>
    %342 = vector.broadcast %334 : vector<16x1xf32> to vector<16x32xf32>
    %343 = arith.subf %328, %342 : vector<16x32xf32>
    %cst_153 = arith.constant 9.99999974E-6 : f32
    %344 = vector.broadcast %cst_153 : f32 to vector<16x1xf32>
    %345 = arith.addf %341, %344 : vector<16x1xf32>
    %346 = math.rsqrt %345 : vector<16x1xf32>
    %347 = vector.broadcast %346 : vector<16x1xf32> to vector<16x32xf32>
    %348 = arith.mulf %343, %347 : vector<16x32xf32>
    %349 = vector.broadcast %329 : vector<1x32xf32> to vector<16x32xf32>
    %350 = arith.mulf %348, %349 : vector<16x32xf32>
    %351 = vector.broadcast %330 : vector<1x32xf32> to vector<16x32xf32>
    %352 = arith.addf %350, %351 : vector<16x32xf32>
    %c0_154 = arith.constant 0 : index
    %c0_155 = arith.constant 0 : index
    %353 = vector.load %arg19[%c0_154, %c0_155] : memref<32x128xbf16, #tpu.memory_space<vmem>>, vector<32x128xbf16>
    %354 = arith.truncf %352 : vector<16x32xf32> to vector<16x32xbf16>
    %cst_156 = arith.constant dense<0.000000e+00> : vector<16x128xf32>
    %355 = tpu.matmul %354, %353, %cst_156 {dimension_numbers = #tpu.dot_dimension_numbers<[1], [0], [0], [1], [0, 0, 1, 1], [], []>} : vector<16x32xbf16>, vector<32x128xbf16>, vector<16x128xf32> -> vector<16x128xf32>
    %c0_157 = arith.constant 0 : index
    %c0_158 = arith.constant 0 : index
    %356 = vector.load %arg20[%c0_157, %c0_158] : memref<16x128xf32, #tpu.memory_space<vmem>>, vector<16x128xf32>
    tpu.vector_store %arg20[%c0_157, %c0_158], %355 {strides = array<i32>} : memref<16x128xf32, #tpu.memory_space<vmem>>, vector<16x128xf32>,
    %357 = tpu.concatenate %51, %41, %213, %203 in 1 : vector<16x32xf32>, vector<16x32xf32>, vector<16x32xf32>, vector<16x32xf32> -> vector<16x128xf32>
    %c0_159 = arith.constant 0 : index
    %c0_160 = arith.constant 0 : index
    %358 = vector.load %arg21[%c0_159, %c0_160] : memref<16x128xf32, #tpu.memory_space<vmem>>, vector<16x128xf32>
    tpu.vector_store %arg21[%c0_159, %c0_160], %357 {strides = array<i32>} : memref<16x128xf32, #tpu.memory_space<vmem>>, vector<16x128xf32>,
    return
  }
}

</mosaic_0001>

<llo_original>
// kernel: tile.11
$region0: #{tile.11}
  %s0 = inlined_call_operand.vmem [shape: f32[16,2,16], index: 0, kind: input, shape index: {}]
  %s1 = inlined_call_operand.vmem [shape: f32[16,32], index: 1, kind: output, shape index: {}]
  $region1: #{tile.11} parent=0
    #allocation0 [shape = 'u8[65536]{0}', space=vmem, size = 0x10000, scoped, tag = 'scoped mem for input reshape']
    %s3 = sshllo.u32 0, 2
    %s4 = smul.addr 2, 15
    %s5 = scalar_lea.vmem %s0, %s4
    %v6 = vld [vmem:[%s5] sm:%s3]
    %s7 = scalar_lea.vmem [#allocation0], 120
    %8 = vst [vmem:[%s7] sm:%s3] %v6
    %s9 = smul.addr 2, 14
    %s10 = scalar_lea.vmem %s0, %s9
    %v11 = vld [vmem:[%s10] sm:%s3]
    %s12 = scalar_lea.vmem [#allocation0], 112
    %13 = vst [vmem:[%s12] sm:%s3] %v11
    %s14 = smul.addr 2, 13
    %s15 = scalar_lea.vmem %s0, %s14
    %v16 = vld [vmem:[%s15] sm:%s3]
    %s17 = scalar_lea.vmem [#allocation0], 104
    %18 = vst [vmem:[%s17] sm:%s3] %v16
    %s19 = smul.addr 2, 12
    %s20 = scalar_lea.vmem %s0, %s19
    %v21 = vld [vmem:[%s20] sm:%s3]
    %s22 = scalar_lea.vmem [#allocation0], 96
    %23 = vst [vmem:[%s22] sm:%s3] %v21
    %s24 = smul.addr 2, 11
    %s25 = scalar_lea.vmem %s0, %s24
    %v26 = vld [vmem:[%s25] sm:%s3]
    %s27 = scalar_lea.vmem [#allocation0], 88
    %28 = vst [vmem:[%s27] sm:%s3] %v26
    %s29 = smul.addr 2, 10
    %s30 = scalar_lea.vmem %s0, %s29
    %v31 = vld [vmem:[%s30] sm:%s3]
    %s32 = scalar_lea.vmem [#allocation0], 80
    %33 = vst [vmem:[%s32] sm:%s3] %v31
    %s34 = smul.addr 2, 9
    %s35 = scalar_lea.vmem %s0, %s34
    %v36 = vld [vmem:[%s35] sm:%s3]
    %s37 = scalar_lea.vmem [#allocation0], 72
    %38 = vst [vmem:[%s37] sm:%s3] %v36
    %s39 = smul.addr 2, 8
    %s40 = scalar_lea.vmem %s0, %s39
    %v41 = vld [vmem:[%s40] sm:%s3]
    %s42 = scalar_lea.vmem [#allocation0], 64
    %43 = vst [vmem:[%s42] sm:%s3] %v41
    %s44 = smul.addr 2, 7
    %s45 = scalar_lea.vmem %s0, %s44
    %v46 = vld [vmem:[%s45] sm:%s3]
    %s47 = scalar_lea.vmem [#allocation0], 56
    %48 = vst [vmem:[%s47] sm:%s3] %v46
    %s49 = smul.addr 2, 6
    %s50 = scalar_lea.vmem %s0, %s49
    %v51 = vld [vmem:[%s50] sm:%s3]
    %s52 = scalar_lea.vmem [#allocation0], 48
    %53 = vst [vmem:[%s52] sm:%s3] %v51
    %s54 = smul.addr 2, 5
    %s55 = scalar_lea.vmem %s0, %s54
    %v56 = vld [vmem:[%s55] sm:%s3]
    %s57 = scalar_lea.vmem [#allocation0], 40
    %58 = vst [vmem:[%s57] sm:%s3] %v56
    %s59 = smul.addr 2, 4
    %s60 = scalar_lea.vmem %s0, %s59
    %v61 = vld [vmem:[%s60] sm:%s3]
    %s62 = scalar_lea.vmem [#allocation0], 32
    %63 = vst [vmem:[%s62] sm:%s3] %v61
    %s64 = smul.addr 2, 3
    %s65 = scalar_lea.vmem %s0, %s64
    %v66 = vld [vmem:[%s65] sm:%s3]
    %s67 = scalar_lea.vmem [#allocation0], 24
    %68 = vst [vmem:[%s67] sm:%s3] %v66
    %s69 = smul.addr 2, 2
    %s70 = scalar_lea.vmem %s0, %s69
    %v71 = vld [vmem:[%s70] sm:%s3]
    %s72 = scalar_lea.vmem [#allocation0], 16
    %73 = vst [vmem:[%s72] sm:%s3] %v71
    %s74 = scalar_lea.vmem %s0, 2
    %v75 = vld [vmem:[%s74] sm:%s3]
    %s76 = scalar_lea.vmem [#allocation0], 8
    %77 = vst [vmem:[%s76] sm:%s3] %v75
    %v78 = vld [vmem:[%s0] sm:%s3]
    %79 = vst [vmem:[#allocation0] sm:%s3] %v78
    %v80 = vld [vmem:[#allocation0] ss:$8 sm:$0xf]
    %v81 = vld [vmem:[#allocation0] ss:$8 sm:$0xf0]
    %vm82 = vcmask 1047556
    %v83 = vsel %vm82, %v81, %v80
    %vm84 = vcmask 130048
    %85 = vst.msk [vmem:[%s1] sm:$0xff] %vm84, %v83
    %s86 = scalar_lea.vmem [#allocation0], 64
    %v87 = vld [vmem:[%s86] ss:$8 sm:$0xf]
    %s88 = scalar_lea.vmem [#allocation0], 64
    %v89 = vld [vmem:[%s88] ss:$8 sm:$0xf0]
    %vm90 = vcmask 1047556
    %v91 = vsel %vm90, %v89, %v87
    %vm92 = vcmask 130048
    %s93 = scalar_lea.vmem %s1, 8
    %94 = vst.msk [vmem:[%s93] sm:$0xff] %vm92, %v91
    %s95 = scalar_lea.vmem [#allocation0], 1
    %v96 = vld [vmem:[%s95] ss:$8 sm:$0xf]
    %s97 = scalar_lea.vmem [#allocation0], 1
    %v98 = vld [vmem:[%s97] ss:$8 sm:$0xf0]
    %vm99 = vcmask 1047556
    %v100 = vsel %vm99, %v98, %v96
    %101 = vrot.lane.b32.xlu0 %v100, 16
    %v102 = vpop.permute.xlu0 %101
    %vm103 = vcmask 261248
    %104 = vst.msk [vmem:[%s1] sm:$0xff] %vm103, %v102
    %s105 = scalar_lea.vmem [#allocation0], 65
    %v106 = vld [vmem:[%s105] ss:$8 sm:$0xf]
    %s107 = scalar_lea.vmem [#allocation0], 65
    %v108 = vld [vmem:[%s107] ss:$8 sm:$0xf0]
    %vm109 = vcmask 1047556
    %v110 = vsel %vm109, %v108, %v106
    %111 = vrot.lane.b32.xlu0 %v110, 16
    %v112 = vpop.permute.xlu0 %111
    %vm113 = vcmask 261248
    %s114 = scalar_lea.vmem %s1, 8
    %115 = vst.msk [vmem:[%s114] sm:$0xff] %vm113, %v112

// kernel: chatmodel_forward.1
$region0: #{chatmodel_forward.1}
  #allocation0 [shape = 'u32[]', space=smem, size = 0x4, offset = 0x4, fixed_abs, tag = 'smem constant byte address 0x4 - core index']
  #allocation1 [shape = 'u32[144,128]{1,0:T(1,128)}', space=vmem, size = 0x12000, scoped, tag = 'internal scratch']
  %s0 = inlined_call_operand.vmem [shape: f32[16,32], index: 0, kind: input, shape index: {}]
  %s1 = inlined_call_operand.vmem [shape: f32[16,32], index: 1, kind: input, shape index: {}]
  %s2 = inlined_call_operand.vmem [shape: f32[16,32], index: 2, kind: input, shape index: {}]
  %s3 = inlined_call_operand.vmem [shape: bf16[32,32], index: 3, kind: input, shape index: {}]
  %s4 = inlined_call_operand.vmem [shape: f32[16,16], index: 4, kind: input, shape index: {}]
  %s5 = inlined_call_operand.vmem [shape: f32[2,1,32], index: 5, kind: input, shape index: {}]
  %s6 = inlined_call_operand.vmem [shape: f32[2,1,32], index: 6, kind: input, shape index: {}]
  %s7 = inlined_call_operand.vmem [shape: bf16[2,32,96], index: 7, kind: input, shape index: {}]
  %s8 = inlined_call_operand.vmem [shape: f32[2,1,96], index: 8, kind: input, shape index: {}]
  %s9 = inlined_call_operand.vmem [shape: bf16[2,32,32], index: 9, kind: input, shape index: {}]
  %s10 = inlined_call_operand.vmem [shape: f32[2,1,32], index: 10, kind: input, shape index: {}]
  %s11 = inlined_call_operand.vmem [shape: f32[2,1,32], index: 11, kind: input, shape index: {}]
  %s12 = inlined_call_operand.vmem [shape: f32[2,1,32], index: 12, kind: input, shape index: {}]
  %s13 = inlined_call_operand.vmem [shape: bf16[2,32,128], index: 13, kind: input, shape index: {}]
  %s14 = inlined_call_operand.vmem [shape: f32[2,1,128], index: 14, kind: input, shape index: {}]
  %s15 = inlined_call_operand.vmem [shape: bf16[2,128,32], index: 15, kind: input, shape index: {}]
  %s16 = inlined_call_operand.vmem [shape: f32[2,1,32], index: 16, kind: input, shape index: {}]
  %s17 = inlined_call_operand.vmem [shape: f32[1,32], index: 17, kind: input, shape index: {}]
  %s18 = inlined_call_operand.vmem [shape: f32[1,32], index: 18, kind: input, shape index: {}]
  %s19 = inlined_call_operand.vmem [shape: bf16[32,128], index: 19, kind: input, shape index: {}]
  %s20 = inlined_call_operand.vmem [shape: f32[16,128], index: 20, kind: output, shape index: {0}]
  %s21 = inlined_call_operand.vmem [shape: f32[16,128], index: 21, kind: output, shape index: {1}]
  %22 = xla_tuple %s20, %s21
  %s23 = sld [smem:[#allocation0]]
  $region98: #{chatmodel_forward.1} parent=0
    _
  %s25 = ssub.s32 1, %s23
  %s26 = scalar_select 0, %s25, %s23
  // Predicated region
  $region2: #{chatmodel_forward.1} parent=0 // pred_check
    _
  $region3: #{chatmodel_forward.1} parent=0 // pred_check_branch
    %28 = sbr.rel (0) target = $region5
  $region4: #{chatmodel_forward.1} parent=0 // pred_region
    _
  $region5: #{chatmodel_forward.1} parent=0 // pred_fallthru
    _
  // Predicated region
  $region6: #{chatmodel_forward.1} parent=0 // pred_check
    _
  $region7: #{chatmodel_forward.1} parent=0 // pred_check_branch
    %30 = sbr.rel (0) target = $region9
  $region8: #{chatmodel_forward.1} parent=0 // pred_region
    _
  $region9: #{chatmodel_forward.1} parent=0 // pred_fallthru
    _
  // Predicated region
  $region10: #{chatmodel_forward.1} parent=0 // pred_check
    _
  $region11: #{chatmodel_forward.1} parent=0 // pred_check_branch
    %32 = sbr.rel (0) target = $region13
  $region12: #{chatmodel_forward.1} parent=0 // pred_region
    _
  $region13: #{chatmodel_forward.1} parent=0 // pred_fallthru
    _
  // Predicated region
  $region14: #{chatmodel_forward.1} parent=0 // pred_check
    _
  $region15: #{chatmodel_forward.1} parent=0 // pred_check_branch
    %34 = sbr.rel (0) target = $region17
  $region16: #{chatmodel_forward.1} parent=0 // pred_region
    _
  $region17: #{chatmodel_forward.1} parent=0 // pred_fallthru
    _
  // Predicated region
  $region18: #{chatmodel_forward.1} parent=0 // pred_check
    _
  $region19: #{chatmodel_forward.1} parent=0 // pred_check_branch
    %36 = sbr.rel (0) target = $region21
  $region20: #{chatmodel_forward.1} parent=0 // pred_region
    _
  $region21: #{chatmodel_forward.1} parent=0 // pred_fallthru
    _
  // Predicated region
  $region22: #{chatmodel_forward.1} parent=0 // pred_check
    _
  $region23: #{chatmodel_forward.1} parent=0 // pred_check_branch
    %38 = sbr.rel (0) target = $region25
  $region24: #{chatmodel_forward.1} parent=0 // pred_region
    _
  $region25: #{chatmodel_forward.1} parent=0 // pred_fallthru
    _
  // Predicated region
  $region26: #{chatmodel_forward.1} parent=0 // pred_check
    _
  $region27: #{chatmodel_forward.1} parent=0 // pred_check_branch
    %40 = sbr.rel (0) target = $region29
  $region28: #{chatmodel_forward.1} parent=0 // pred_region
    _
  $region29: #{chatmodel_forward.1} parent=0 // pred_fallthru
    _
  // Predicated region
  $region30: #{chatmodel_forward.1} parent=0 // pred_check
    _
  $region31: #{chatmodel_forward.1} parent=0 // pred_check_branch
    %42 = sbr.rel (0) target = $region33
  $region32: #{chatmodel_forward.1} parent=0 // pred_region
    _
  $region33: #{chatmodel_forward.1} parent=0 // pred_fallthru
    _
  // Predicated region
  $region34: #{chatmodel_forward.1} parent=0 // pred_check
    _
  $region35: #{chatmodel_forward.1} parent=0 // pred_check_branch
    %44 = sbr.rel (0) target = $region37
  $region36: #{chatmodel_forward.1} parent=0 // pred_region
    _
  $region37: #{chatmodel_forward.1} parent=0 // pred_fallthru
    _
  // Predicated region
  $region38: #{chatmodel_forward.1} parent=0 // pred_check
    _
  $region39: #{chatmodel_forward.1} parent=0 // pred_check_branch
    %46 = sbr.rel (0) target = $region41
  $region40: #{chatmodel_forward.1} parent=0 // pred_region
    _
  $region41: #{chatmodel_forward.1} parent=0 // pred_fallthru
    _
  // Predicated region
  $region42: #{chatmodel_forward.1} parent=0 // pred_check
    _
  $region43: #{chatmodel_forward.1} parent=0 // pred_check_branch
    %48 = sbr.rel (0) target = $region45
  $region44: #{chatmodel_forward.1} parent=0 // pred_region
    _
  $region45: #{chatmodel_forward.1} parent=0 // pred_fallthru
    _
  // Predicated region
  $region46: #{chatmodel_forward.1} parent=0 // pred_check
    _
  $region47: #{chatmodel_forward.1} parent=0 // pred_check_branch
    %50 = sbr.rel (0) target = $region49
  $region48: #{chatmodel_forward.1} parent=0 // pred_region
    _
  $region49: #{chatmodel_forward.1} parent=0 // pred_fallthru
    _
  // Predicated region
  $region50: #{chatmodel_forward.1} parent=0 // pred_check
    _
  $region51: #{chatmodel_forward.1} parent=0 // pred_check_branch
    %52 = sbr.rel (0) target = $region53
  $region52: #{chatmodel_forward.1} parent=0 // pred_region
    _
  $region53: #{chatmodel_forward.1} parent=0 // pred_fallthru
    _
  // Predicated region
  $region54: #{chatmodel_forward.1} parent=0 // pred_check
    _
  $region55: #{chatmodel_forward.1} parent=0 // pred_check_branch
    %54 = sbr.rel (0) target = $region57
  $region56: #{chatmodel_forward.1} parent=0 // pred_region
    _
  $region57: #{chatmodel_forward.1} parent=0 // pred_fallthru
    _
  // Predicated region
  $region58: #{chatmodel_forward.1} parent=0 // pred_check
    _
  $region59: #{chatmodel_forward.1} parent=0 // pred_check_branch
    %56 = sbr.rel (0) target = $region61
  $region60: #{chatmodel_forward.1} parent=0 // pred_region
    _
  $region61: #{chatmodel_forward.1} parent=0 // pred_fallthru
    _
  // Predicated region
  $region62: #{chatmodel_forward.1} parent=0 // pred_check
    _
  $region63: #{chatmodel_forward.1} parent=0 // pred_check_branch
    %58 = sbr.rel (0) target = $region65
  $region64: #{chatmodel_forward.1} parent=0 // pred_region
    _
  $region65: #{chatmodel_forward.1} parent=0 // pred_fallthru
    _
  // Predicated region
  $region66: #{chatmodel_forward.1} parent=0 // pred_check
    _
  $region67: #{chatmodel_forward.1} parent=0 // pred_check_branch
    %60 = sbr.rel (0) target = $region69
  $region68: #{chatmodel_forward.1} parent=0 // pred_region
    _
  $region69: #{chatmodel_forward.1} parent=0 // pred_fallthru
    _
  // Predicated region
  $region70: #{chatmodel_forward.1} parent=0 // pred_check
    _
  $region71: #{chatmodel_forward.1} parent=0 // pred_check_branch
    %62 = sbr.rel (0) target = $region73
  $region72: #{chatmodel_forward.1} parent=0 // pred_region
    _
  $region73: #{chatmodel_forward.1} parent=0 // pred_fallthru
    _
  // Predicated region
  $region74: #{chatmodel_forward.1} parent=0 // pred_check
    _
  $region75: #{chatmodel_forward.1} parent=0 // pred_check_branch
    %64 = sbr.rel (0) target = $region77
  $region76: #{chatmodel_forward.1} parent=0 // pred_region
    _
  $region77: #{chatmodel_forward.1} parent=0 // pred_fallthru
    _
  // Predicated region
  $region78: #{chatmodel_forward.1} parent=0 // pred_check
    _
  $region79: #{chatmodel_forward.1} parent=0 // pred_check_branch
    %66 = sbr.rel (0) target = $region81
  $region80: #{chatmodel_forward.1} parent=0 // pred_region
    _
  $region81: #{chatmodel_forward.1} parent=0 // pred_fallthru
    _
  %v68 = vld [vmem:[%s0] sm:$0xff]
  %v69 = vld [vmem:[%s0 + $0x8] sm:$0xff]
  %v70 = vld [vmem:[%s1] sm:$0xff]
  %v71 = vld [vmem:[%s1 + $0x8] sm:$0xff]
  %v72 = vld [vmem:[%s2] sm:$0xff]
  %v73 = vld [vmem:[%s2 + $0x8] sm:$0xff]
  %v74 = vld [vmem:[%s3] sm:$0xf]
  %v75 = vld [vmem:[%s3 + $0x4] sm:$0xf]
  %v76 = vld [vmem:[%s3 + $0x8] sm:$0xf]
  %v77 = vld [vmem:[%s3 + $0xc] sm:$0xf]
  %v78 = vld [vmem:[%s4] sm:$0xff]
  %v79 = vld [vmem:[%s4 + $0x8] sm:$0xff]
  %v80 = vld [vmem:[%s5] sm:$0x1]
  %v81 = vld [vmem:[%s6] sm:$0x1]
  %vm82 = vcmask 261120
  %v83 = vsel %vm82, %v68, 0.0
  %84 = vadd.xlane.f32.xlu0 %v83
  %v85 = vpop.xlane.xlu0 %84
  %v86 = vsel %vm82, %v69, 0.0
  %87 = vadd.xlane.f32.xlu0 %v86
  %v88 = vpop.xlane.xlu0 %87
  %v89 = vrcp.pop 32.0
  %v90 = vmul.f32 %v85, %v89
  %v91 = vmul.f32 %v88, %v89
  %v92 = vsub.f32 %v68, %v90
  %v93 = vsub.f32 %v69, %v91
  %v94 = vmul.f32 %v92, %v92
  %v95 = vmul.f32 %v93, %v93
  %v96 = vsel %vm82, %v94, 0.0
  %97 = vadd.xlane.f32.xlu0 %v96
  %v98 = vpop.xlane.xlu0 %97
  %v99 = vsel %vm82, %v95, 0.0
  %100 = vadd.xlane.f32.xlu0 %v99
  %v101 = vpop.xlane.xlu0 %100
  %v102 = vmul.f32 %v98, %v89
  %v103 = vmul.f32 %v101, %v89
  %v104 = vadd.f32 %v102, 1e-05
  %v105 = vadd.f32 %v103, 1e-05
  %v106 = vrsqrt.pop %v104
  %v107 = vrsqrt.pop %v105
  %v108 = vmul.f32 %v92, %v106
  %v109 = vmul.f32 %v93, %v107
  %v111 = vlaneseq
  %v112 = vshrl.u32 %v111, 7
  %v113 = vsub.s32 0, %v112
  %v114 = vrot.slane %v80, %v113
  %v116 = vmul.f32 %v108, %v114
  %v117 = vmul.f32 %v109, %v114
  %v119 = vlaneseq
  %v120 = vshrl.u32 %v119, 7
  %v121 = vsub.s32 0, %v120
  %v122 = vrot.slane %v81, %v121
  %v124 = vadd.f32 %v116, %v122
  %v125 = vadd.f32 %v117, %v122
  %v126 = vld [vmem:[%s7] sm:$0xf]
  %v127 = vld [vmem:[%s7 + $0x4] sm:$0xf]
  %v128 = vld [vmem:[%s7 + $0x8] sm:$0xf]
  %v129 = vld [vmem:[%s7 + $0xc] sm:$0xf]
  %v130 = vpack.c.bf16 %v125, %v124
  %v131 = vld [vmem:[%s8] sm:$0x1]
  %v133 = vlaneseq
  %v134 = vshrl.u32 %v133, 7
  %v135 = vsub.s32 0, %v134
  %v136 = vrot.slane %v131, %v135
  %v142 = vunpack.c.l.b16 %v126
  %v143 = vunpack.c.l.b16 %v127
  %v144 = vunpack.c.l.b16 %v128
  %v145 = vunpack.c.l.b16 %v129
  %v146 = vpack.c.b16 %v143, %v142
  %v147 = vpack.c.b16 %v145, %v144
  %v151 = vsel %vm82, %v130, 0
  %153 = vmatprep.subr.bf16.mxu0 0
  %154 = vmatpush1.bf16.msra.mxu0 %v146
  %155 = vmatprep.subr.bf16.mxu0 0
  %156 = vmatpush1.bf16.msra.mxu0 %v147
  %157 = vmatprep.subr.bf16.mxu0 0
  %158 = vmatpush1.bf16.msra.mxu0 0
  %159 = vmatprep.subr.bf16.mxu0 0
  %160 = vmatpush1.bf16.msra.mxu0 0
  %161 = vmatprep.subr.bf16.mxu0 0
  %162 = vmatpush1.bf16.msra.mxu0 0
  %163 = vmatprep.subr.bf16.mxu0 0
  %164 = vmatpush1.bf16.msra.mxu0 0
  %165 = vmatprep.subr.bf16.mxu0 0
  %166 = vmatpush1.bf16.msra.mxu0 0
  %167 = vmatprep.subr.bf16.mxu0 0
  %168 = vmatpush1.bf16.msra.mxu0 0
  %169 = vmatprep.subr.bf16.mxu0 0
  %170 = vmatpush1.bf16.msra.mxu0 0
  %171 = vmatprep.subr.bf16.mxu0 0
  %172 = vmatpush1.bf16.msra.mxu0 0
  %173 = vmatprep.subr.bf16.mxu0 0
  %174 = vmatpush1.bf16.msra.mxu0 0
  %175 = vmatprep.subr.bf16.mxu0 0
  %176 = vmatpush1.bf16.msra.mxu0 0
  %177 = vmatprep.subr.bf16.mxu0 0
  %178 = vmatpush1.bf16.msra.mxu0 0
  %179 = vmatprep.subr.bf16.mxu0 0
  %180 = vmatpush1.bf16.msra.mxu0 0
  %181 = vmatprep.subr.bf16.mxu0 0
  %182 = vmatpush1.bf16.msra.mxu0 0
  %183 = vmatprep.subr.bf16.mxu0 0
  %184 = vmatpush1.bf16.msra.mxu0 0
  %185 = vmatprep.mubr.bf16.mxu0 0
  %186 = vmatmul.mubr.bf16.gmra.mrb[0].mxu0 %v151
  %v187 = vpop.f32.mrb[0].mxu0
  %v188 = vadd.f32 %v136, %v187
  %v189 = vpop.f32.mrb[0].mxu0
  %v190 = vpop.f32.mrb[0].mxu0
  %v191 = vadd.f32 %v136, %v190
  %v192 = vpop.f32.mrb[0].mxu0
  %193 = vdwg.mxu0
  %v194 = vmul.f32 %v188, %v70
  %v195 = vmul.f32 %v191, %v71
  %v196 = vpack.c.bf16 %v191, %v188
  %v201 = vunpack.c.l.b16 %v74
  %v202 = vunpack.c.l.b16 %v75
  %v203 = vunpack.c.l.b16 %v76
  %v204 = vunpack.c.l.b16 %v77
  %v205 = vpack.c.b16 %v202, %v201
  %v206 = vpack.c.b16 %v204, %v203
  %v210 = vsel %vm82, %v196, 0
  %212 = vmatprep.subr.bf16.mxu0 0
  %213 = vmatpush1.bf16.msra.mxu0 %v205
  %214 = vmatprep.subr.bf16.mxu0 0
  %215 = vmatpush1.bf16.msra.mxu0 %v206
  %216 = vmatprep.subr.bf16.mxu0 0
  %217 = vmatpush1.bf16.msra.mxu0 0
  %218 = vmatprep.subr.bf16.mxu0 0
  %219 = vmatpush1.bf16.msra.mxu0 0
  %220 = vmatprep.subr.bf16.mxu0 0
  %221 = vmatpush1.bf16.msra.mxu0 0
  %222 = vmatprep.subr.bf16.mxu0 0
  %223 = vmatpush1.bf16.msra.mxu0 0
  %224 = vmatprep.subr.bf16.mxu0 0
  %225 = vmatpush1.bf16.msra.mxu0 0
  %226 = vmatprep.subr.bf16.mxu0 0
  %227 = vmatpush1.bf16.msra.mxu0 0
  %228 = vmatprep.subr.bf16.mxu0 0
  %229 = vmatpush1.bf16.msra.mxu0 0
  %230 = vmatprep.subr.bf16.mxu0 0
  %231 = vmatpush1.bf16.msra.mxu0 0
  %232 = vmatprep.subr.bf16.mxu0 0
  %233 = vmatpush1.bf16.msra.mxu0 0
  %234 = vmatprep.subr.bf16.mxu0 0
  %235 = vmatpush1.bf16.msra.mxu0 0
  %236 = vmatprep.subr.bf16.mxu0 0
  %237 = vmatpush1.bf16.msra.mxu0 0
  %238 = vmatprep.subr.bf16.mxu0 0
  %239 = vmatpush1.bf16.msra.mxu0 0
  %240 = vmatprep.subr.bf16.mxu0 0
  %241 = vmatpush1.bf16.msra.mxu0 0
  %242 = vmatprep.subr.bf16.mxu0 0
  %243 = vmatpush1.bf16.msra.mxu0 0
  %244 = vmatprep.mubr.bf16.mxu0 0
  %245 = vmatmul.mubr.bf16.gmra.mrb[0].mxu0 %v210
  %v246 = vpop.f32.mrb[0].mxu0
  %v247 = vadd.f32 0.0, %v246
  %v248 = vpop.f32.mrb[0].mxu0
  %v249 = vpop.f32.mrb[0].mxu0
  %v250 = vadd.f32 0.0, %v249
  %v251 = vpop.f32.mrb[0].mxu0
  %252 = vdwg.mxu0
  %v253 = vmul.f32 %v247, %v72
  %v254 = vmul.f32 %v250, %v73
  %v255 = vadd.f32 %v194, %v253
  %v256 = vadd.f32 %v195, %v254
  %259 = vrot.lane.b32.xlu0 %v70, 32
  %v260 = vpop.permute.xlu0 %259
  %261 = vrot.lane.b32.xlu0 %v71, 32
  %v262 = vpop.permute.xlu0 %261
  %v265 = vmul.f32 %v188, %v260
  %v266 = vmul.f32 %v191, %v262
  %268 = vrot.lane.b32.xlu0 %v196, 96
  %v269 = vpop.permute.xlu0 %268
  %v271 = vsel %vm82, %v269, 0
  %273 = vmatprep.subr.bf16.mxu0 0
  %274 = vmatpush1.bf16.msra.mxu0 %v205
  %275 = vmatprep.subr.bf16.mxu0 0
  %276 = vmatpush1.bf16.msra.mxu0 %v206
  %277 = vmatprep.subr.bf16.mxu0 0
  %278 = vmatpush1.bf16.msra.mxu0 0
  %279 = vmatprep.subr.bf16.mxu0 0
  %280 = vmatpush1.bf16.msra.mxu0 0
  %281 = vmatprep.subr.bf16.mxu0 0
  %282 = vmatpush1.bf16.msra.mxu0 0
  %283 = vmatprep.subr.bf16.mxu0 0
  %284 = vmatpush1.bf16.msra.mxu0 0
  %285 = vmatprep.subr.bf16.mxu0 0
  %286 = vmatpush1.bf16.msra.mxu0 0
  %287 = vmatprep.subr.bf16.mxu0 0
  %288 = vmatpush1.bf16.msra.mxu0 0
  %289 = vmatprep.subr.bf16.mxu0 0
  %290 = vmatpush1.bf16.msra.mxu0 0
  %291 = vmatprep.subr.bf16.mxu0 0
  %292 = vmatpush1.bf16.msra.mxu0 0
  %293 = vmatprep.subr.bf16.mxu0 0
  %294 = vmatpush1.bf16.msra.mxu0 0
  %295 = vmatprep.subr.bf16.mxu0 0
  %296 = vmatpush1.bf16.msra.mxu0 0
  %297 = vmatprep.subr.bf16.mxu0 0
  %298 = vmatpush1.bf16.msra.mxu0 0
  %299 = vmatprep.subr.bf16.mxu0 0
  %300 = vmatpush1.bf16.msra.mxu0 0
  %301 = vmatprep.subr.bf16.mxu0 0
  %302 = vmatpush1.bf16.msra.mxu0 0
  %303 = vmatprep.subr.bf16.mxu0 0
  %304 = vmatpush1.bf16.msra.mxu0 0
  %305 = vmatprep.mubr.bf16.mxu0 0
  %306 = vmatmul.mubr.bf16.gmra.mrb[0].mxu0 %v271
  %v307 = vpop.f32.mrb[0].mxu0
  %v308 = vadd.f32 0.0, %v307
  %v309 = vpop.f32.mrb[0].mxu0
  %v310 = vpop.f32.mrb[0].mxu0
  %v311 = vadd.f32 0.0, %v310
  %v312 = vpop.f32.mrb[0].mxu0
  %313 = vdwg.mxu0
  %v314 = vmul.f32 %v308, %v72
  %v315 = vmul.f32 %v311, %v73
  %318 = vrot.lane.b32.xlu0 %v314, 32
  %v319 = vpop.permute.xlu0 %318
  %320 = vrot.lane.b32.xlu0 %v315, 32
  %v321 = vpop.permute.xlu0 %320
  %v324 = vadd.f32 %v265, %v319
  %v325 = vadd.f32 %v266, %v321
  %v326 = vpack.c.bf16 %v256, %v255
  %v327 = vpack.c.bf16 %v325, %v324
  %329 = vrot.lane.b32.xlu0 %v327, 96
  %v330 = vpop.permute.xlu0 %329
  %vm331 = vcmask 130048
  %v333 = vsel %vm331, %v326, 0
  %v336 = vsel %vm331, %v330, 0
  %338 = vmatprep.subr.bf16.mxu0 0
  %339 = vmatpush1.bf16.xpose.msra.mxu0 %v336
  %340 = vmatprep.subr.bf16.mxu0 0
  %341 = vmatpush1.bf16.xpose.msra.mxu0 0
  %342 = vmatprep.subr.bf16.mxu0 0
  %343 = vmatpush1.bf16.xpose.msra.mxu0 0
  %344 = vmatprep.subr.bf16.mxu0 0
  %345 = vmatpush1.bf16.xpose.msra.mxu0 0
  %346 = vmatprep.subr.bf16.mxu0 0
  %347 = vmatpush1.bf16.xpose.msra.mxu0 0
  %348 = vmatprep.subr.bf16.mxu0 0
  %349 = vmatpush1.bf16.xpose.msra.mxu0 0
  %350 = vmatprep.subr.bf16.mxu0 0
  %351 = vmatpush1.bf16.xpose.msra.mxu0 0
  %352 = vmatprep.subr.bf16.mxu0 0
  %353 = vmatpush1.bf16.xpose.msra.mxu0 0
  %354 = vmatprep.subr.bf16.mxu0 0
  %355 = vmatpush1.bf16.xpose.msra.mxu0 0
  %356 = vmatprep.subr.bf16.mxu0 0
  %357 = vmatpush1.bf16.xpose.msra.mxu0 0
  %358 = vmatprep.subr.bf16.mxu0 0
  %359 = vmatpush1.bf16.xpose.msra.mxu0 0
  %360 = vmatprep.subr.bf16.mxu0 0
  %361 = vmatpush1.bf16.xpose.msra.mxu0 0
  %362 = vmatprep.subr.bf16.mxu0 0
  %363 = vmatpush1.bf16.xpose.msra.mxu0 0
  %364 = vmatprep.subr.bf16.mxu0 0
  %365 = vmatpush1.bf16.xpose.msra.mxu0 0
  %366 = vmatprep.subr.bf16.mxu0 0
  %367 = vmatpush1.bf16.xpose.msra.mxu0 0
  %368 = vmatprep.subr.bf16.mxu0 0
  %369 = vmatpush1.bf16.xpose.msra.mxu0 0
  %370 = vmatprep.mubr.bf16.mxu0 0
  %371 = vmatmul.mubr.bf16.gmra.mrb[0].mxu0 %v333
  %v372 = vpop.f32.mrb[0].mxu0
  %v373 = vadd.f32 0.0, %v372
  %v374 = vpop.f32.mrb[0].mxu0
  %v375 = vpop.f32.mrb[0].mxu0
  %v376 = vadd.f32 0.0, %v375
  %v377 = vpop.f32.mrb[0].mxu0
  %378 = vdwg.mxu0
  %v379 = vmul.f32 %v373, 0.25
  %v380 = vmul.f32 %v376, 0.25
  %v381 = vadd.f32 %v379, %v78
  %v382 = vadd.f32 %v380, %v79
  %v383 = vsel %vm331, %v381, -inf
  %384 = vmax.xlane.f32.xlu0 %v383
  %v385 = vpop.xlane.xlu0 %384
  %v386 = vsel %vm331, %v382, -inf
  %387 = vmax.xlane.f32.xlu0 %v386
  %v388 = vpop.xlane.xlu0 %387
  %v389 = vsub.f32 %v381, %v385
  %v390 = vsub.f32 %v382, %v388
  %v391 = vmul.f32 %v389, 1.442695
  %v392 = vpow.pop %v391
  %v393 = vmul.f32 %v390, 1.442695
  %v394 = vpow.pop %v393
  %v395 = vsel %vm331, %v392, 0.0
  %396 = vadd.xlane.f32.xlu0 %v395
  %v397 = vpop.xlane.xlu0 %396
  %v398 = vsel %vm331, %v394, 0.0
  %399 = vadd.xlane.f32.xlu0 %v398
  %v400 = vpop.xlane.xlu0 %399
  %v401 = vrcp.pop %v397
  %v402 = vrcp.pop %v400
  %v403 = vmul.f32 %v392, %v401
  %v404 = vmul.f32 %v394, %v402
  %v405 = vpack.c.bf16 %v404, %v403
  %406 = vrot.lane.b32.xlu0 %v196, 64
  %v407 = vpop.permute.xlu0 %406
  %v410 = vsel %vm331, %v405, 0
  %412 = vmatprep.subr.bf16.mxu0 0
  %413 = vmatpush1.bf16.msra.mxu0 %v407
  %414 = vmatprep.subr.bf16.mxu0 0
  %415 = vmatpush1.bf16.msra.mxu0 0
  %416 = vmatprep.subr.bf16.mxu0 0
  %417 = vmatpush1.bf16.msra.mxu0 0
  %418 = vmatprep.subr.bf16.mxu0 0
  %419 = vmatpush1.bf16.msra.mxu0 0
  %420 = vmatprep.subr.bf16.mxu0 0
  %421 = vmatpush1.bf16.msra.mxu0 0
  %422 = vmatprep.subr.bf16.mxu0 0
  %423 = vmatpush1.bf16.msra.mxu0 0
  %424 = vmatprep.subr.bf16.mxu0 0
  %425 = vmatpush1.bf16.msra.mxu0 0
  %426 = vmatprep.subr.bf16.mxu0 0
  %427 = vmatpush1.bf16.msra.mxu0 0
  %428 = vmatprep.subr.bf16.mxu0 0
  %429 = vmatpush1.bf16.msra.mxu0 0
  %430 = vmatprep.subr.bf16.mxu0 0
  %431 = vmatpush1.bf16.msra.mxu0 0
  %432 = vmatprep.subr.bf16.mxu0 0
  %433 = vmatpush1.bf16.msra.mxu0 0
  %434 = vmatprep.subr.bf16.mxu0 0
  %435 = vmatpush1.bf16.msra.mxu0 0
  %436 = vmatprep.subr.bf16.mxu0 0
  %437 = vmatpush1.bf16.msra.mxu0 0
  %438 = vmatprep.subr.bf16.mxu0 0
  %439 = vmatpush1.bf16.msra.mxu0 0
  %440 = vmatprep.subr.bf16.mxu0 0
  %441 = vmatpush1.bf16.msra.mxu0 0
  %442 = vmatprep.subr.bf16.mxu0 0
  %443 = vmatpush1.bf16.msra.mxu0 0
  %444 = vmatprep.mubr.bf16.mxu0 0
  %445 = vmatmul.mubr.bf16.gmra.mrb[0].mxu0 %v410
  %v446 = vpop.f32.mrb[0].mxu0
  %v447 = vadd.f32 0.0, %v446
  %v448 = vpop.f32.mrb[0].mxu0
  %v449 = vpop.f32.mrb[0].mxu0
  %v450 = vadd.f32 0.0, %v449
  %v451 = vpop.f32.mrb[0].mxu0
  %452 = vdwg.mxu0
  %454 = vrot.lane.b32.xlu0 %v326, 112
  %v455 = vpop.permute.xlu0 %454
  %456 = vrot.lane.b32.xlu0 %v327, 80
  %v457 = vpop.permute.xlu0 %456
  %v459 = vsel %vm331, %v455, 0
  %v462 = vsel %vm331, %v457, 0
  %464 = vmatprep.subr.bf16.mxu0 0
  %465 = vmatpush1.bf16.xpose.msra.mxu0 %v462
  %466 = vmatprep.subr.bf16.mxu0 0
  %467 = vmatpush1.bf16.xpose.msra.mxu0 0
  %468 = vmatprep.subr.bf16.mxu0 0
  %469 = vmatpush1.bf16.xpose.msra.mxu0 0
  %470 = vmatprep.subr.bf16.mxu0 0
  %471 = vmatpush1.bf16.xpose.msra.mxu0 0
  %472 = vmatprep.subr.bf16.mxu0 0
  %473 = vmatpush1.bf16.xpose.msra.mxu0 0
  %474 = vmatprep.subr.bf16.mxu0 0
  %475 = vmatpush1.bf16.xpose.msra.mxu0 0
  %476 = vmatprep.subr.bf16.mxu0 0
  %477 = vmatpush1.bf16.xpose.msra.mxu0 0
  %478 = vmatprep.subr.bf16.mxu0 0
  %479 = vmatpush1.bf16.xpose.msra.mxu0 0
  %480 = vmatprep.subr.bf16.mxu0 0
  %481 = vmatpush1.bf16.xpose.msra.mxu0 0
  %482 = vmatprep.subr.bf16.mxu0 0
  %483 = vmatpush1.bf16.xpose.msra.mxu0 0
  %484 = vmatprep.subr.bf16.mxu0 0
  %485 = vmatpush1.bf16.xpose.msra.mxu0 0
  %486 = vmatprep.subr.bf16.mxu0 0
  %487 = vmatpush1.bf16.xpose.msra.mxu0 0
  %488 = vmatprep.subr.bf16.mxu0 0
  %489 = vmatpush1.bf16.xpose.msra.mxu0 0
  %490 = vmatprep.subr.bf16.mxu0 0
  %491 = vmatpush1.bf16.xpose.msra.mxu0 0
  %492 = vmatprep.subr.bf16.mxu0 0
  %493 = vmatpush1.bf16.xpose.msra.mxu0 0
  %494 = vmatprep.subr.bf16.mxu0 0
  %495 = vmatpush1.bf16.xpose.msra.mxu0 0
  %496 = vmatprep.mubr.bf16.mxu0 0
  %497 = vmatmul.mubr.bf16.gmra.mrb[0].mxu0 %v459
  %v498 = vpop.f32.mrb[0].mxu0
  %v499 = vadd.f32 0.0, %v498
  %v500 = vpop.f32.mrb[0].mxu0
  %v501 = vpop.f32.mrb[0].mxu0
  %v502 = vadd.f32 0.0, %v501
  %v503 = vpop.f32.mrb[0].mxu0
  %504 = vdwg.mxu0
  %v505 = vmul.f32 %v499, 0.25
  %v506 = vmul.f32 %v502, 0.25
  %v507 = vadd.f32 %v505, %v78
  %v508 = vadd.f32 %v506, %v79
  %v509 = vsel %vm331, %v507, -inf
  %510 = vmax.xlane.f32.xlu0 %v509
  %v511 = vpop.xlane.xlu0 %510
  %v512 = vsel %vm331, %v508, -inf
  %513 = vmax.xlane.f32.xlu0 %v512
  %v514 = vpop.xlane.xlu0 %513
  %v515 = vsub.f32 %v507, %v511
  %v516 = vsub.f32 %v508, %v514
  %v517 = vmul.f32 %v515, 1.442695
  %v518 = vpow.pop %v517
  %v519 = vmul.f32 %v516, 1.442695
  %v520 = vpow.pop %v519
  %v521 = vsel %vm331, %v518, 0.0
  %522 = vadd.xlane.f32.xlu0 %v521
  %v523 = vpop.xlane.xlu0 %522
  %v524 = vsel %vm331, %v520, 0.0
  %525 = vadd.xlane.f32.xlu0 %v524
  %v526 = vpop.xlane.xlu0 %525
  %v527 = vrcp.pop %v523
  %v528 = vrcp.pop %v526
  %v529 = vmul.f32 %v518, %v527
  %v530 = vmul.f32 %v520, %v528
  %v531 = vpack.c.bf16 %v530, %v529
  %532 = vrot.lane.b32.xlu0 %v196, 48
  %v533 = vpop.permute.xlu0 %532
  %v536 = vsel %vm331, %v531, 0
  %538 = vmatprep.subr.bf16.mxu0 0
  %539 = vmatpush1.bf16.msra.mxu0 %v533
  %540 = vmatprep.subr.bf16.mxu0 0
  %541 = vmatpush1.bf16.msra.mxu0 0
  %542 = vmatprep.subr.bf16.mxu0 0
  %543 = vmatpush1.bf16.msra.mxu0 0
  %544 = vmatprep.subr.bf16.mxu0 0
  %545 = vmatpush1.bf16.msra.mxu0 0
  %546 = vmatprep.subr.bf16.mxu0 0
  %547 = vmatpush1.bf16.msra.mxu0 0
  %548 = vmatprep.subr.bf16.mxu0 0
  %549 = vmatpush1.bf16.msra.mxu0 0
  %550 = vmatprep.subr.bf16.mxu0 0
  %551 = vmatpush1.bf16.msra.mxu0 0
  %552 = vmatprep.subr.bf16.mxu0 0
  %553 = vmatpush1.bf16.msra.mxu0 0
  %554 = vmatprep.subr.bf16.mxu0 0
  %555 = vmatpush1.bf16.msra.mxu0 0
  %556 = vmatprep.subr.bf16.mxu0 0
  %557 = vmatpush1.bf16.msra.mxu0 0
  %558 = vmatprep.subr.bf16.mxu0 0
  %559 = vmatpush1.bf16.msra.mxu0 0
  %560 = vmatprep.subr.bf16.mxu0 0
  %561 = vmatpush1.bf16.msra.mxu0 0
  %562 = vmatprep.subr.bf16.mxu0 0
  %563 = vmatpush1.bf16.msra.mxu0 0
  %564 = vmatprep.subr.bf16.mxu0 0
  %565 = vmatpush1.bf16.msra.mxu0 0
  %566 = vmatprep.subr.bf16.mxu0 0
  %567 = vmatpush1.bf16.msra.mxu0 0
  %568 = vmatprep.subr.bf16.mxu0 0
  %569 = vmatpush1.bf16.msra.mxu0 0
  %570 = vmatprep.mubr.bf16.mxu0 0
  %571 = vmatmul.mubr.bf16.gmra.mrb[0].mxu0 %v536
  %v572 = vpop.f32.mrb[0].mxu0
  %v573 = vadd.f32 0.0, %v572
  %v574 = vpop.f32.mrb[0].mxu0
  %v575 = vpop.f32.mrb[0].mxu0
  %v576 = vadd.f32 0.0, %v575
  %v577 = vpop.f32.mrb[0].mxu0
  %578 = vdwg.mxu0
  %581 = vrot.lane.b32.xlu0 %v573, 16
  %v582 = vpop.permute.xlu0 %581
  %583 = vrot.lane.b32.xlu0 %v576, 16
  %v584 = vpop.permute.xlu0 %583
  %v587 = vsel %vm331, %v447, %v582
  %v588 = vsel %vm331, %v450, %v584
  %v589 = vld [vmem:[%s9] sm:$0xf]
  %v590 = vld [vmem:[%s9 + $0x4] sm:$0xf]
  %v591 = vld [vmem:[%s9 + $0x8] sm:$0xf]
  %v592 = vld [vmem:[%s9 + $0xc] sm:$0xf]
  %v593 = vpack.c.bf16 %v588, %v587
  %v594 = vld [vmem:[%s10] sm:$0x1]
  %v596 = vlaneseq
  %v597 = vshrl.u32 %v596, 7
  %v598 = vsub.s32 0, %v597
  %v599 = vrot.slane %v594, %v598
  %v605 = vunpack.c.l.b16 %v589
  %v606 = vunpack.c.l.b16 %v590
  %v607 = vunpack.c.l.b16 %v591
  %v608 = vunpack.c.l.b16 %v592
  %v609 = vpack.c.b16 %v606, %v605
  %v610 = vpack.c.b16 %v608, %v607
  %v614 = vsel %vm82, %v593, 0
  %616 = vmatprep.subr.bf16.mxu0 0
  %617 = vmatpush1.bf16.msra.mxu0 %v609
  %618 = vmatprep.subr.bf16.mxu0 0
  %619 = vmatpush1.bf16.msra.mxu0 %v610
  %620 = vmatprep.subr.bf16.mxu0 0
  %621 = vmatpush1.bf16.msra.mxu0 0
  %622 = vmatprep.subr.bf16.mxu0 0
  %623 = vmatpush1.bf16.msra.mxu0 0
  %624 = vmatprep.subr.bf16.mxu0 0
  %625 = vmatpush1.bf16.msra.mxu0 0
  %626 = vmatprep.subr.bf16.mxu0 0
  %627 = vmatpush1.bf16.msra.mxu0 0
  %628 = vmatprep.subr.bf16.mxu0 0
  %629 = vmatpush1.bf16.msra.mxu0 0
  %630 = vmatprep.subr.bf16.mxu0 0
  %631 = vmatpush1.bf16.msra.mxu0 0
  %632 = vmatprep.subr.bf16.mxu0 0
  %633 = vmatpush1.bf16.msra.mxu0 0
  %634 = vmatprep.subr.bf16.mxu0 0
  %635 = vmatpush1.bf16.msra.mxu0 0
  %636 = vmatprep.subr.bf16.mxu0 0
  %637 = vmatpush1.bf16.msra.mxu0 0
  %638 = vmatprep.subr.bf16.mxu0 0
  %639 = vmatpush1.bf16.msra.mxu0 0
  %640 = vmatprep.subr.bf16.mxu0 0
  %641 = vmatpush1.bf16.msra.mxu0 0
  %642 = vmatprep.subr.bf16.mxu0 0
  %643 = vmatpush1.bf16.msra.mxu0 0
  %644 = vmatprep.subr.bf16.mxu0 0
  %645 = vmatpush1.bf16.msra.mxu0 0
  %646 = vmatprep.subr.bf16.mxu0 0
  %647 = vmatpush1.bf16.msra.mxu0 0
  %648 = vmatprep.mubr.bf16.mxu0 0
  %649 = vmatmul.mubr.bf16.gmra.mrb[0].mxu0 %v614
  %v650 = vpop.f32.mrb[0].mxu0
  %v651 = vadd.f32 %v599, %v650
  %v652 = vpop.f32.mrb[0].mxu0
  %v653 = vpop.f32.mrb[0].mxu0
  %v654 = vadd.f32 %v599, %v653
  %v655 = vpop.f32.mrb[0].mxu0
  %656 = vdwg.mxu0
  %v657 = vmul.f32 %v124, 2.0
  %v658 = vmul.f32 %v125, 2.0
  %v659 = vadd.f32 %v657, %v651
  %v660 = vadd.f32 %v658, %v654
  %v661 = vld [vmem:[%s11] sm:$0x1]
  %v662 = vld [vmem:[%s12] sm:$0x1]
  %v663 = vsel %vm82, %v659, 0.0
  %664 = vadd.xlane.f32.xlu0 %v663
  %v665 = vpop.xlane.xlu0 %664
  %v666 = vsel %vm82, %v660, 0.0
  %667 = vadd.xlane.f32.xlu0 %v666
  %v668 = vpop.xlane.xlu0 %667
  %v669 = vmul.f32 %v665, %v89
  %v670 = vmul.f32 %v668, %v89
  %v671 = vsub.f32 %v659, %v669
  %v672 = vsub.f32 %v660, %v670
  %v673 = vmul.f32 %v671, %v671
  %v674 = vmul.f32 %v672, %v672
  %v675 = vsel %vm82, %v673, 0.0
  %676 = vadd.xlane.f32.xlu0 %v675
  %v677 = vpop.xlane.xlu0 %676
  %v678 = vsel %vm82, %v674, 0.0
  %679 = vadd.xlane.f32.xlu0 %v678
  %v680 = vpop.xlane.xlu0 %679
  %v681 = vmul.f32 %v677, %v89
  %v682 = vmul.f32 %v680, %v89
  %v683 = vadd.f32 %v681, 1e-05
  %v684 = vadd.f32 %v682, 1e-05
  %v685 = vrsqrt.pop %v683
  %v686 = vrsqrt.pop %v684
  %v687 = vmul.f32 %v671, %v685
  %v688 = vmul.f32 %v672, %v686
  %v690 = vlaneseq
  %v691 = vshrl.u32 %v690, 7
  %v692 = vsub.s32 0, %v691
  %v693 = vrot.slane %v661, %v692
  %v695 = vmul.f32 %v687, %v693
  %v696 = vmul.f32 %v688, %v693
  %v698 = vlaneseq
  %v699 = vshrl.u32 %v698, 7
  %v700 = vsub.s32 0, %v699
  %v701 = vrot.slane %v662, %v700
  %v703 = vadd.f32 %v695, %v701
  %v704 = vadd.f32 %v696, %v701
  %v705 = vld [vmem:[%s13] sm:$0xf]
  %v706 = vld [vmem:[%s13 + $0x4] sm:$0xf]
  %v707 = vld [vmem:[%s13 + $0x8] sm:$0xf]
  %v708 = vld [vmem:[%s13 + $0xc] sm:$0xf]
  %v709 = vpack.c.bf16 %v704, %v703
  %v710 = vld [vmem:[%s14] sm:$0x1]
  %v712 = vlaneseq
  %v713 = vshrl.u32 %v712, 7
  %v714 = vsub.s32 0, %v713
  %v715 = vrot.slane %v710, %v714
  %v721 = vunpack.c.l.b16 %v705
  %v722 = vunpack.c.l.b16 %v706
  %v723 = vunpack.c.l.b16 %v707
  %v724 = vunpack.c.l.b16 %v708
  %v725 = vpack.c.b16 %v722, %v721
  %v726 = vpack.c.b16 %v724, %v723
  %v730 = vsel %vm82, %v709, 0
  %732 = vmatprep.subr.bf16.mxu0 0
  %733 = vmatpush1.bf16.msra.mxu0 %v725
  %734 = vmatprep.subr.bf16.mxu0 0
  %735 = vmatpush1.bf16.msra.mxu0 %v726
  %736 = vmatprep.subr.bf16.mxu0 0
  %737 = vmatpush1.bf16.msra.mxu0 0
  %738 = vmatprep.subr.bf16.mxu0 0
  %739 = vmatpush1.bf16.msra.mxu0 0
  %740 = vmatprep.subr.bf16.mxu0 0
  %741 = vmatpush1.bf16.msra.mxu0 0
  %742 = vmatprep.subr.bf16.mxu0 0
  %743 = vmatpush1.bf16.msra.mxu0 0
  %744 = vmatprep.subr.bf16.mxu0 0
  %745 = vmatpush1.bf16.msra.mxu0 0
  %746 = vmatprep.subr.bf16.mxu0 0
  %747 = vmatpush1.bf16.msra.mxu0 0
  %748 = vmatprep.subr.bf16.mxu0 0
  %749 = vmatpush1.bf16.msra.mxu0 0
  %750 = vmatprep.subr.bf16.mxu0 0
  %751 = vmatpush1.bf16.msra.mxu0 0
  %752 = vmatprep.subr.bf16.mxu0 0
  %753 = vmatpush1.bf16.msra.mxu0 0
  %754 = vmatprep.subr.bf16.mxu0 0
  %755 = vmatpush1.bf16.msra.mxu0 0
  %756 = vmatprep.subr.bf16.mxu0 0
  %757 = vmatpush1.bf16.msra.mxu0 0
  %758 = vmatprep.subr.bf16.mxu0 0
  %759 = vmatpush1.bf16.msra.mxu0 0
  %760 = vmatprep.subr.bf16.mxu0 0
  %761 = vmatpush1.bf16.msra.mxu0 0
  %762 = vmatprep.subr.bf16.mxu0 0
  %763 = vmatpush1.bf16.msra.mxu0 0
  %764 = vmatprep.mubr.bf16.mxu0 0
  %765 = vmatmul.mubr.bf16.gmra.mrb[0].mxu0 %v730
  %v766 = vpop.f32.mrb[0].mxu0
  %v767 = vadd.f32 %v715, %v766
  %v768 = vpop.f32.mrb[0].mxu0
  %v769 = vpop.f32.mrb[0].mxu0
  %v770 = vadd.f32 %v715, %v769
  %v771 = vpop.f32.mrb[0].mxu0
  %772 = vdwg.mxu0
  %v773 = vmul.f32 %v767, 0.5
  %v774 = vmul.f32 %v770, 0.5
  %v775 = vmul.f32 %v767, 0.7978846
  %v776 = vmul.f32 %v770, 0.7978846
  %v777 = vmul.f32 %v767, 0.044715
  %v778 = vmul.f32 %v770, 0.044715
  %v779 = vmul.f32 %v777, %v767
  %v780 = vmul.f32 %v778, %v770
  %v781 = vadd.f32 %v779, 1.0
  %v782 = vadd.f32 %v780, 1.0
  %v783 = vmul.f32 %v775, %v781
  %v784 = vmul.f32 %v776, %v782
  %v785 = vtanh.pop %v783
  %v786 = vtanh.pop %v784
  %v787 = vadd.f32 %v785, 1.0
  %v788 = vadd.f32 %v786, 1.0
  %v789 = vmul.f32 %v773, %v787
  %v790 = vmul.f32 %v774, %v788
  %v791 = vld [vmem:[%s15] sm:$0xf]
  %v792 = vld [vmem:[%s15 + $0x4] sm:$0xf]
  %v793 = vld [vmem:[%s15 + $0x8] sm:$0xf]
  %v794 = vld [vmem:[%s15 + $0xc] sm:$0xf]
  %v795 = vld [vmem:[%s15 + $0x10] sm:$0xf]
  %v796 = vld [vmem:[%s15 + $0x14] sm:$0xf]
  %v797 = vld [vmem:[%s15 + $0x18] sm:$0xf]
  %v798 = vld [vmem:[%s15 + $0x1c] sm:$0xf]
  %v799 = vld [vmem:[%s15 + $0x20] sm:$0xf]
  %v800 = vld [vmem:[%s15 + $0x24] sm:$0xf]
  %v801 = vld [vmem:[%s15 + $0x28] sm:$0xf]
  %v802 = vld [vmem:[%s15 + $0x2c] sm:$0xf]
  %v803 = vld [vmem:[%s15 + $0x30] sm:$0xf]
  %v804 = vld [vmem:[%s15 + $0x34] sm:$0xf]
  %v805 = vld [vmem:[%s15 + $0x38] sm:$0xf]
  %v806 = vld [vmem:[%s15 + $0x3c] sm:$0xf]
  %v807 = vpack.c.bf16 %v790, %v789
  %v808 = vld [vmem:[%s16] sm:$0x1]
  %v810 = vlaneseq
  %v811 = vshrl.u32 %v810, 7
  %v812 = vsub.s32 0, %v811
  %v813 = vrot.slane %v808, %v812
  %v831 = vunpack.c.l.b16 %v791
  %v832 = vunpack.c.l.b16 %v792
  %v833 = vunpack.c.l.b16 %v793
  %v834 = vunpack.c.l.b16 %v794
  %v835 = vunpack.c.l.b16 %v795
  %v836 = vunpack.c.l.b16 %v796
  %v837 = vunpack.c.l.b16 %v797
  %v838 = vunpack.c.l.b16 %v798
  %v839 = vunpack.c.l.b16 %v799
  %v840 = vunpack.c.l.b16 %v800
  %v841 = vunpack.c.l.b16 %v801
  %v842 = vunpack.c.l.b16 %v802
  %v843 = vunpack.c.l.b16 %v803
  %v844 = vunpack.c.l.b16 %v804
  %v845 = vunpack.c.l.b16 %v805
  %v846 = vunpack.c.l.b16 %v806
  %v847 = vpack.c.b16 %v832, %v831
  %v848 = vpack.c.b16 %v834, %v833
  %v849 = vpack.c.b16 %v836, %v835
  %v850 = vpack.c.b16 %v838, %v837
  %v851 = vpack.c.b16 %v840, %v839
  %v852 = vpack.c.b16 %v842, %v841
  %v853 = vpack.c.b16 %v844, %v843
  %v854 = vpack.c.b16 %v846, %v845
  %863 = vmatprep.subr.bf16.mxu0 0
  %864 = vmatpush1.bf16.msra.mxu0 %v847
  %865 = vmatprep.subr.bf16.mxu0 0
  %866 = vmatpush1.bf16.msra.mxu0 %v848
  %867 = vmatprep.subr.bf16.mxu0 0
  %868 = vmatpush1.bf16.msra.mxu0 %v849
  %869 = vmatprep.subr.bf16.mxu0 0
  %870 = vmatpush1.bf16.msra.mxu0 %v850
  %871 = vmatprep.subr.bf16.mxu0 0
  %872 = vmatpush1.bf16.msra.mxu0 %v851
  %873 = vmatprep.subr.bf16.mxu0 0
  %874 = vmatpush1.bf16.msra.mxu0 %v852
  %875 = vmatprep.subr.bf16.mxu0 0
  %876 = vmatpush1.bf16.msra.mxu0 %v853
  %877 = vmatprep.subr.bf16.mxu0 0
  %878 = vmatpush1.bf16.msra.mxu0 %v854
  %879 = vmatprep.subr.bf16.mxu0 0
  %880 = vmatpush1.bf16.msra.mxu0 0
  %881 = vmatprep.subr.bf16.mxu0 0
  %882 = vmatpush1.bf16.msra.mxu0 0
  %883 = vmatprep.subr.bf16.mxu0 0
  %884 = vmatpush1.bf16.msra.mxu0 0
  %885 = vmatprep.subr.bf16.mxu0 0
  %886 = vmatpush1.bf16.msra.mxu0 0
  %887 = vmatprep.subr.bf16.mxu0 0
  %888 = vmatpush1.bf16.msra.mxu0 0
  %889 = vmatprep.subr.bf16.mxu0 0
  %890 = vmatpush1.bf16.msra.mxu0 0
  %891 = vmatprep.subr.bf16.mxu0 0
  %892 = vmatpush1.bf16.msra.mxu0 0
  %893 = vmatprep.subr.bf16.mxu0 0
  %894 = vmatpush1.bf16.msra.mxu0 0
  %895 = vmatprep.mubr.bf16.mxu0 0
  %896 = vmatmul.mubr.bf16.gmra.mrb[0].mxu0 %v807
  %v897 = vpop.f32.mrb[0].mxu0
  %v898 = vadd.f32 %v813, %v897
  %v899 = vpop.f32.mrb[0].mxu0
  %v900 = vpop.f32.mrb[0].mxu0
  %v901 = vadd.f32 %v813, %v900
  %v902 = vpop.f32.mrb[0].mxu0
  %903 = vdwg.mxu0
  %v904 = vmul.f32 %v703, 2.0
  %v905 = vmul.f32 %v704, 2.0
  %v906 = vadd.f32 %v904, %v898
  %v907 = vadd.f32 %v905, %v901
  %s908 = scalar_lea.vmem %s5, 1
  %v909 = vld [vmem:[%s908] sm:$0x1]
  %s910 = scalar_lea.vmem %s6, 1
  %v911 = vld [vmem:[%s910] sm:$0x1]
  %v912 = vsel %vm82, %v906, 0.0
  %913 = vadd.xlane.f32.xlu0 %v912
  %v914 = vpop.xlane.xlu0 %913
  %v915 = vsel %vm82, %v907, 0.0
  %916 = vadd.xlane.f32.xlu0 %v915
  %v917 = vpop.xlane.xlu0 %916
  %v918 = vmul.f32 %v914, %v89
  %v919 = vmul.f32 %v917, %v89
  %v920 = vsub.f32 %v906, %v918
  %v921 = vsub.f32 %v907, %v919
  %v922 = vmul.f32 %v920, %v920
  %v923 = vmul.f32 %v921, %v921
  %v924 = vsel %vm82, %v922, 0.0
  %925 = vadd.xlane.f32.xlu0 %v924
  %v926 = vpop.xlane.xlu0 %925
  %v927 = vsel %vm82, %v923, 0.0
  %928 = vadd.xlane.f32.xlu0 %v927
  %v929 = vpop.xlane.xlu0 %928
  %v930 = vmul.f32 %v926, %v89
  %v931 = vmul.f32 %v929, %v89
  %v932 = vadd.f32 %v930, 1e-05
  %v933 = vadd.f32 %v931, 1e-05
  %v934 = vrsqrt.pop %v932
  %v935 = vrsqrt.pop %v933
  %v936 = vmul.f32 %v920, %v934
  %v937 = vmul.f32 %v921, %v935
  %v939 = vlaneseq
  %v940 = vshrl.u32 %v939, 7
  %v941 = vsub.s32 0, %v940
  %v942 = vrot.slane %v909, %v941
  %v944 = vmul.f32 %v936, %v942
  %v945 = vmul.f32 %v937, %v942
  %v947 = vlaneseq
  %v948 = vshrl.u32 %v947, 7
  %v949 = vsub.s32 0, %v948
  %v950 = vrot.slane %v911, %v949
  %v952 = vadd.f32 %v944, %v950
  %v953 = vadd.f32 %v945, %v950
  %s954 = scalar_lea.vmem %s7, 16
  %v955 = vld [vmem:[%s954] sm:$0xf]
  %v956 = vld [vmem:[%s954 + $0x4] sm:$0xf]
  %v957 = vld [vmem:[%s954 + $0x8] sm:$0xf]
  %v958 = vld [vmem:[%s954 + $0xc] sm:$0xf]
  %v959 = vpack.c.bf16 %v953, %v952
  %s960 = scalar_lea.vmem %s8, 1
  %v961 = vld [vmem:[%s960] sm:$0x1]
  %v963 = vlaneseq
  %v964 = vshrl.u32 %v963, 7
  %v965 = vsub.s32 0, %v964
  %v966 = vrot.slane %v961, %v965
  %v972 = vunpack.c.l.b16 %v955
  %v973 = vunpack.c.l.b16 %v956
  %v974 = vunpack.c.l.b16 %v957
  %v975 = vunpack.c.l.b16 %v958
  %v976 = vpack.c.b16 %v973, %v972
  %v977 = vpack.c.b16 %v975, %v974
  %v981 = vsel %vm82, %v959, 0
  %983 = vmatprep.subr.bf16.mxu0 0
  %984 = vmatpush1.bf16.msra.mxu0 %v976
  %985 = vmatprep.subr.bf16.mxu0 0
  %986 = vmatpush1.bf16.msra.mxu0 %v977
  %987 = vmatprep.subr.bf16.mxu0 0
  %988 = vmatpush1.bf16.msra.mxu0 0
  %989 = vmatprep.subr.bf16.mxu0 0
  %990 = vmatpush1.bf16.msra.mxu0 0
  %991 = vmatprep.subr.bf16.mxu0 0
  %992 = vmatpush1.bf16.msra.mxu0 0
  %993 = vmatprep.subr.bf16.mxu0 0
  %994 = vmatpush1.bf16.msra.mxu0 0
  %995 = vmatprep.subr.bf16.mxu0 0
  %996 = vmatpush1.bf16.msra.mxu0 0
  %997 = vmatprep.subr.bf16.mxu0 0
  %998 = vmatpush1.bf16.msra.mxu0 0
  %999 = vmatprep.subr.bf16.mxu0 0
  %1000 = vmatpush1.bf16.msra.mxu0 0
  %1001 = vmatprep.subr.bf16.mxu0 0
  %1002 = vmatpush1.bf16.msra.mxu0 0
  %1003 = vmatprep.subr.bf16.mxu0 0
  %1004 = vmatpush1.bf16.msra.mxu0 0
  %1005 = vmatprep.subr.bf16.mxu0 0
  %1006 = vmatpush1.bf16.msra.mxu0 0
  %1007 = vmatprep.subr.bf16.mxu0 0
  %1008 = vmatpush1.bf16.msra.mxu0 0
  %1009 = vmatprep.subr.bf16.mxu0 0
  %1010 = vmatpush1.bf16.msra.mxu0 0
  %1011 = vmatprep.subr.bf16.mxu0 0
  %1012 = vmatpush1.bf16.msra.mxu0 0
  %1013 = vmatprep.subr.bf16.mxu0 0
  %1014 = vmatpush1.bf16.msra.mxu0 0
  %1015 = vmatprep.mubr.bf16.mxu0 0
  %1016 = vmatmul.mubr.bf16.gmra.mrb[0].mxu0 %v981
  %v1017 = vpop.f32.mrb[0].mxu0
  %v1018 = vadd.f32 %v966, %v1017
  %v1019 = vpop.f32.mrb[0].mxu0
  %v1020 = vpop.f32.mrb[0].mxu0
  %v1021 = vadd.f32 %v966, %v1020
  %v1022 = vpop.f32.mrb[0].mxu0
  %1023 = vdwg.mxu0
  %v1024 = vmul.f32 %v1018, %v70
  %v1025 = vmul.f32 %v1021, %v71
  %v1026 = vpack.c.bf16 %v1021, %v1018
  %v1028 = vsel %vm82, %v1026, 0
  %1030 = vmatprep.subr.bf16.mxu0 0
  %1031 = vmatpush1.bf16.msra.mxu0 %v205
  %1032 = vmatprep.subr.bf16.mxu0 0
  %1033 = vmatpush1.bf16.msra.mxu0 %v206
  %1034 = vmatprep.subr.bf16.mxu0 0
  %1035 = vmatpush1.bf16.msra.mxu0 0
  %1036 = vmatprep.subr.bf16.mxu0 0
  %1037 = vmatpush1.bf16.msra.mxu0 0
  %1038 = vmatprep.subr.bf16.mxu0 0
  %1039 = vmatpush1.bf16.msra.mxu0 0
  %1040 = vmatprep.subr.bf16.mxu0 0
  %1041 = vmatpush1.bf16.msra.mxu0 0
  %1042 = vmatprep.subr.bf16.mxu0 0
  %1043 = vmatpush1.bf16.msra.mxu0 0
  %1044 = vmatprep.subr.bf16.mxu0 0
  %1045 = vmatpush1.bf16.msra.mxu0 0
  %1046 = vmatprep.subr.bf16.mxu0 0
  %1047 = vmatpush1.bf16.msra.mxu0 0
  %1048 = vmatprep.subr.bf16.mxu0 0
  %1049 = vmatpush1.bf16.msra.mxu0 0
  %1050 = vmatprep.subr.bf16.mxu0 0
  %1051 = vmatpush1.bf16.msra.mxu0 0
  %1052 = vmatprep.subr.bf16.mxu0 0
  %1053 = vmatpush1.bf16.msra.mxu0 0
  %1054 = vmatprep.subr.bf16.mxu0 0
  %1055 = vmatpush1.bf16.msra.mxu0 0
  %1056 = vmatprep.subr.bf16.mxu0 0
  %1057 = vmatpush1.bf16.msra.mxu0 0
  %1058 = vmatprep.subr.bf16.mxu0 0
  %1059 = vmatpush1.bf16.msra.mxu0 0
  %1060 = vmatprep.subr.bf16.mxu0 0
  %1061 = vmatpush1.bf16.msra.mxu0 0
  %1062 = vmatprep.mubr.bf16.mxu0 0
  %1063 = vmatmul.mubr.bf16.gmra.mrb[0].mxu0 %v1028
  %v1064 = vpop.f32.mrb[0].mxu0
  %v1065 = vadd.f32 0.0, %v1064
  %v1066 = vpop.f32.mrb[0].mxu0
  %v1067 = vpop.f32.mrb[0].mxu0
  %v1068 = vadd.f32 0.0, %v1067
  %v1069 = vpop.f32.mrb[0].mxu0
  %1070 = vdwg.mxu0
  %v1071 = vmul.f32 %v1065, %v72
  %v1072 = vmul.f32 %v1068, %v73
  %v1073 = vadd.f32 %v1024, %v1071
  %v1074 = vadd.f32 %v1025, %v1072
  %v1075 = vmul.f32 %v1018, %v260
  %v1076 = vmul.f32 %v1021, %v262
  %1078 = vrot.lane.b32.xlu0 %v1026, 96
  %v1079 = vpop.permute.xlu0 %1078
  %v1081 = vsel %vm82, %v1079, 0
  %1083 = vmatprep.subr.bf16.mxu0 0
  %1084 = vmatpush1.bf16.msra.mxu0 %v205
  %1085 = vmatprep.subr.bf16.mxu0 0
  %1086 = vmatpush1.bf16.msra.mxu0 %v206
  %1087 = vmatprep.subr.bf16.mxu0 0
  %1088 = vmatpush1.bf16.msra.mxu0 0
  %1089 = vmatprep.subr.bf16.mxu0 0
  %1090 = vmatpush1.bf16.msra.mxu0 0
  %1091 = vmatprep.subr.bf16.mxu0 0
  %1092 = vmatpush1.bf16.msra.mxu0 0
  %1093 = vmatprep.subr.bf16.mxu0 0
  %1094 = vmatpush1.bf16.msra.mxu0 0
  %1095 = vmatprep.subr.bf16.mxu0 0
  %1096 = vmatpush1.bf16.msra.mxu0 0
  %1097 = vmatprep.subr.bf16.mxu0 0
  %1098 = vmatpush1.bf16.msra.mxu0 0
  %1099 = vmatprep.subr.bf16.mxu0 0
  %1100 = vmatpush1.bf16.msra.mxu0 0
  %1101 = vmatprep.subr.bf16.mxu0 0
  %1102 = vmatpush1.bf16.msra.mxu0 0
  %1103 = vmatprep.subr.bf16.mxu0 0
  %1104 = vmatpush1.bf16.msra.mxu0 0
  %1105 = vmatprep.subr.bf16.mxu0 0
  %1106 = vmatpush1.bf16.msra.mxu0 0
  %1107 = vmatprep.subr.bf16.mxu0 0
  %1108 = vmatpush1.bf16.msra.mxu0 0
  %1109 = vmatprep.subr.bf16.mxu0 0
  %1110 = vmatpush1.bf16.msra.mxu0 0
  %1111 = vmatprep.subr.bf16.mxu0 0
  %1112 = vmatpush1.bf16.msra.mxu0 0
  %1113 = vmatprep.subr.bf16.mxu0 0
  %1114 = vmatpush1.bf16.msra.mxu0 0
  %1115 = vmatprep.mubr.bf16.mxu0 0
  %1116 = vmatmul.mubr.bf16.gmra.mrb[0].mxu0 %v1081
  %v1117 = vpop.f32.mrb[0].mxu0
  %v1118 = vadd.f32 0.0, %v1117
  %v1119 = vpop.f32.mrb[0].mxu0
  %v1120 = vpop.f32.mrb[0].mxu0
  %v1121 = vadd.f32 0.0, %v1120
  %v1122 = vpop.f32.mrb[0].mxu0
  %1123 = vdwg.mxu0
  %v1124 = vmul.f32 %v1118, %v72
  %v1125 = vmul.f32 %v1121, %v73
  %1128 = vrot.lane.b32.xlu0 %v1124, 32
  %v1129 = vpop.permute.xlu0 %1128
  %1130 = vrot.lane.b32.xlu0 %v1125, 32
  %v1131 = vpop.permute.xlu0 %1130
  %v1134 = vadd.f32 %v1075, %v1129
  %v1135 = vadd.f32 %v1076, %v1131
  %v1136 = vpack.c.bf16 %v1074, %v1073
  %v1137 = vpack.c.bf16 %v1135, %v1134
  %1139 = vrot.lane.b32.xlu0 %v1137, 96
  %v1140 = vpop.permute.xlu0 %1139
  %v1142 = vsel %vm331, %v1136, 0
  %v1145 = vsel %vm331, %v1140, 0
  %1147 = vmatprep.subr.bf16.mxu0 0
  %1148 = vmatpush1.bf16.xpose.msra.mxu0 %v1145
  %1149 = vmatprep.subr.bf16.mxu0 0
  %1150 = vmatpush1.bf16.xpose.msra.mxu0 0
  %1151 = vmatprep.subr.bf16.mxu0 0
  %1152 = vmatpush1.bf16.xpose.msra.mxu0 0
  %1153 = vmatprep.subr.bf16.mxu0 0
  %1154 = vmatpush1.bf16.xpose.msra.mxu0 0
  %1155 = vmatprep.subr.bf16.mxu0 0
  %1156 = vmatpush1.bf16.xpose.msra.mxu0 0
  %1157 = vmatprep.subr.bf16.mxu0 0
  %1158 = vmatpush1.bf16.xpose.msra.mxu0 0
  %1159 = vmatprep.subr.bf16.mxu0 0
  %1160 = vmatpush1.bf16.xpose.msra.mxu0 0
  %1161 = vmatprep.subr.bf16.mxu0 0
  %1162 = vmatpush1.bf16.xpose.msra.mxu0 0
  %1163 = vmatprep.subr.bf16.mxu0 0
  %1164 = vmatpush1.bf16.xpose.msra.mxu0 0
  %1165 = vmatprep.subr.bf16.mxu0 0
  %1166 = vmatpush1.bf16.xpose.msra.mxu0 0
  %1167 = vmatprep.subr.bf16.mxu0 0
  %1168 = vmatpush1.bf16.xpose.msra.mxu0 0
  %1169 = vmatprep.subr.bf16.mxu0 0
  %1170 = vmatpush1.bf16.xpose.msra.mxu0 0
  %1171 = vmatprep.subr.bf16.mxu0 0
  %1172 = vmatpush1.bf16.xpose.msra.mxu0 0
  %1173 = vmatprep.subr.bf16.mxu0 0
  %1174 = vmatpush1.bf16.xpose.msra.mxu0 0
  %1175 = vmatprep.subr.bf16.mxu0 0
  %1176 = vmatpush1.bf16.xpose.msra.mxu0 0
  %1177 = vmatprep.subr.bf16.mxu0 0
  %1178 = vmatpush1.bf16.xpose.msra.mxu0 0
  %1179 = vmatprep.mubr.bf16.mxu0 0
  %1180 = vmatmul.mubr.bf16.gmra.mrb[0].mxu0 %v1142
  %v1181 = vpop.f32.mrb[0].mxu0
  %v1182 = vadd.f32 0.0, %v1181
  %v1183 = vpop.f32.mrb[0].mxu0
  %v1184 = vpop.f32.mrb[0].mxu0
  %v1185 = vadd.f32 0.0, %v1184
  %v1186 = vpop.f32.mrb[0].mxu0
  %1187 = vdwg.mxu0
  %v1188 = vmul.f32 %v1182, 0.25
  %v1189 = vmul.f32 %v1185, 0.25
  %v1190 = vadd.f32 %v1188, %v78
  %v1191 = vadd.f32 %v1189, %v79
  %v1192 = vsel %vm331, %v1190, -inf
  %1193 = vmax.xlane.f32.xlu0 %v1192
  %v1194 = vpop.xlane.xlu0 %1193
  %v1195 = vsel %vm331, %v1191, -inf
  %1196 = vmax.xlane.f32.xlu0 %v1195
  %v1197 = vpop.xlane.xlu0 %1196
  %v1198 = vsub.f32 %v1190, %v1194
  %v1199 = vsub.f32 %v1191, %v1197
  %v1200 = vmul.f32 %v1198, 1.442695
  %v1201 = vpow.pop %v1200
  %v1202 = vmul.f32 %v1199, 1.442695
  %v1203 = vpow.pop %v1202
  %v1204 = vsel %vm331, %v1201, 0.0
  %1205 = vadd.xlane.f32.xlu0 %v1204
  %v1206 = vpop.xlane.xlu0 %1205
  %v1207 = vsel %vm331, %v1203, 0.0
  %1208 = vadd.xlane.f32.xlu0 %v1207
  %v1209 = vpop.xlane.xlu0 %1208
  %v1210 = vrcp.pop %v1206
  %v1211 = vrcp.pop %v1209
  %v1212 = vmul.f32 %v1201, %v1210
  %v1213 = vmul.f32 %v1203, %v1211
  %v1214 = vpack.c.bf16 %v1213, %v1212
  %1215 = vrot.lane.b32.xlu0 %v1026, 64
  %v1216 = vpop.permute.xlu0 %1215
  %v1219 = vsel %vm331, %v1214, 0
  %1221 = vmatprep.subr.bf16.mxu0 0
  %1222 = vmatpush1.bf16.msra.mxu0 %v1216
  %1223 = vmatprep.subr.bf16.mxu0 0
  %1224 = vmatpush1.bf16.msra.mxu0 0
  %1225 = vmatprep.subr.bf16.mxu0 0
  %1226 = vmatpush1.bf16.msra.mxu0 0
  %1227 = vmatprep.subr.bf16.mxu0 0
  %1228 = vmatpush1.bf16.msra.mxu0 0
  %1229 = vmatprep.subr.bf16.mxu0 0
  %1230 = vmatpush1.bf16.msra.mxu0 0
  %1231 = vmatprep.subr.bf16.mxu0 0
  %1232 = vmatpush1.bf16.msra.mxu0 0
  %1233 = vmatprep.subr.bf16.mxu0 0
  %1234 = vmatpush1.bf16.msra.mxu0 0
  %1235 = vmatprep.subr.bf16.mxu0 0
  %1236 = vmatpush1.bf16.msra.mxu0 0
  %1237 = vmatprep.subr.bf16.mxu0 0
  %1238 = vmatpush1.bf16.msra.mxu0 0
  %1239 = vmatprep.subr.bf16.mxu0 0
  %1240 = vmatpush1.bf16.msra.mxu0 0
  %1241 = vmatprep.subr.bf16.mxu0 0
  %1242 = vmatpush1.bf16.msra.mxu0 0
  %1243 = vmatprep.subr.bf16.mxu0 0
  %1244 = vmatpush1.bf16.msra.mxu0 0
  %1245 = vmatprep.subr.bf16.mxu0 0
  %1246 = vmatpush1.bf16.msra.mxu0 0
  %1247 = vmatprep.subr.bf16.mxu0 0
  %1248 = vmatpush1.bf16.msra.mxu0 0
  %1249 = vmatprep.subr.bf16.mxu0 0
  %1250 = vmatpush1.bf16.msra.mxu0 0
  %1251 = vmatprep.subr.bf16.mxu0 0
  %1252 = vmatpush1.bf16.msra.mxu0 0
  %1253 = vmatprep.mubr.bf16.mxu0 0
  %1254 = vmatmul.mubr.bf16.gmra.mrb[0].mxu0 %v1219
  %v1255 = vpop.f32.mrb[0].mxu0
  %v1256 = vadd.f32 0.0, %v1255
  %v1257 = vpop.f32.mrb[0].mxu0
  %v1258 = vpop.f32.mrb[0].mxu0
  %v1259 = vadd.f32 0.0, %v1258
  %v1260 = vpop.f32.mrb[0].mxu0
  %1261 = vdwg.mxu0
  %1263 = vrot.lane.b32.xlu0 %v1136, 112
  %v1264 = vpop.permute.xlu0 %1263
  %1265 = vrot.lane.b32.xlu0 %v1137, 80
  %v1266 = vpop.permute.xlu0 %1265
  %v1268 = vsel %vm331, %v1264, 0
  %v1271 = vsel %vm331, %v1266, 0
  %1273 = vmatprep.subr.bf16.mxu0 0
  %1274 = vmatpush1.bf16.xpose.msra.mxu0 %v1271
  %1275 = vmatprep.subr.bf16.mxu0 0
  %1276 = vmatpush1.bf16.xpose.msra.mxu0 0
  %1277 = vmatprep.subr.bf16.mxu0 0
  %1278 = vmatpush1.bf16.xpose.msra.mxu0 0
  %1279 = vmatprep.subr.bf16.mxu0 0
  %1280 = vmatpush1.bf16.xpose.msra.mxu0 0
  %1281 = vmatprep.subr.bf16.mxu0 0
  %1282 = vmatpush1.bf16.xpose.msra.mxu0 0
  %1283 = vmatprep.subr.bf16.mxu0 0
  %1284 = vmatpush1.bf16.xpose.msra.mxu0 0
  %1285 = vmatprep.subr.bf16.mxu0 0
  %1286 = vmatpush1.bf16.xpose.msra.mxu0 0
  %1287 = vmatprep.subr.bf16.mxu0 0
  %1288 = vmatpush1.bf16.xpose.msra.mxu0 0
  %1289 = vmatprep.subr.bf16.mxu0 0
  %1290 = vmatpush1.bf16.xpose.msra.mxu0 0
  %1291 = vmatprep.subr.bf16.mxu0 0
  %1292 = vmatpush1.bf16.xpose.msra.mxu0 0
  %1293 = vmatprep.subr.bf16.mxu0 0
  %1294 = vmatpush1.bf16.xpose.msra.mxu0 0
  %1295 = vmatprep.subr.bf16.mxu0 0
  %1296 = vmatpush1.bf16.xpose.msra.mxu0 0
  %1297 = vmatprep.subr.bf16.mxu0 0
  %1298 = vmatpush1.bf16.xpose.msra.mxu0 0
  %1299 = vmatprep.subr.bf16.mxu0 0
  %1300 = vmatpush1.bf16.xpose.msra.mxu0 0
  %1301 = vmatprep.subr.bf16.mxu0 0
  %1302 = vmatpush1.bf16.xpose.msra.mxu0 0
  %1303 = vmatprep.subr.bf16.mxu0 0
  %1304 = vmatpush1.bf16.xpose.msra.mxu0 0
  %1305 = vmatprep.mubr.bf16.mxu0 0
  %1306 = vmatmul.mubr.bf16.gmra.mrb[0].mxu0 %v1268
  %v1307 = vpop.f32.mrb[0].mxu0
  %v1308 = vadd.f32 0.0, %v1307
  %v1309 = vpop.f32.mrb[0].mxu0
  %v1310 = vpop.f32.mrb[0].mxu0
  %v1311 = vadd.f32 0.0, %v1310
  %v1312 = vpop.f32.mrb[0].mxu0
  %1313 = vdwg.mxu0
  %v1314 = vmul.f32 %v1308, 0.25
  %v1315 = vmul.f32 %v1311, 0.25
  %v1316 = vadd.f32 %v1314, %v78
  %v1317 = vadd.f32 %v1315, %v79
  %v1318 = vsel %vm331, %v1316, -inf
  %1319 = vmax.xlane.f32.xlu0 %v1318
  %v1320 = vpop.xlane.xlu0 %1319
  %v1321 = vsel %vm331, %v1317, -inf
  %1322 = vmax.xlane.f32.xlu0 %v1321
  %v1323 = vpop.xlane.xlu0 %1322
  %v1324 = vsub.f32 %v1316, %v1320
  %v1325 = vsub.f32 %v1317, %v1323
  %v1326 = vmul.f32 %v1324, 1.442695
  %v1327 = vpow.pop %v1326
  %v1328 = vmul.f32 %v1325, 1.442695
  %v1329 = vpow.pop %v1328
  %v1330 = vsel %vm331, %v1327, 0.0
  %1331 = vadd.xlane.f32.xlu0 %v1330
  %v1332 = vpop.xlane.xlu0 %1331
  %v1333 = vsel %vm331, %v1329, 0.0
  %1334 = vadd.xlane.f32.xlu0 %v1333
  %v1335 = vpop.xlane.xlu0 %1334
  %v1336 = vrcp.pop %v1332
  %v1337 = vrcp.pop %v1335
  %v1338 = vmul.f32 %v1327, %v1336
  %v1339 = vmul.f32 %v1329, %v1337
  %v1340 = vpack.c.bf16 %v1339, %v1338
  %1341 = vrot.lane.b32.xlu0 %v1026, 48
  %v1342 = vpop.permute.xlu0 %1341
  %v1345 = vsel %vm331, %v1340, 0
  %1347 = vmatprep.subr.bf16.mxu0 0
  %1348 = vmatpush1.bf16.msra.mxu0 %v1342
  %1349 = vmatprep.subr.bf16.mxu0 0
  %1350 = vmatpush1.bf16.msra.mxu0 0
  %1351 = vmatprep.subr.bf16.mxu0 0
  %1352 = vmatpush1.bf16.msra.mxu0 0
  %1353 = vmatprep.subr.bf16.mxu0 0
  %1354 = vmatpush1.bf16.msra.mxu0 0
  %1355 = vmatprep.subr.bf16.mxu0 0
  %1356 = vmatpush1.bf16.msra.mxu0 0
  %1357 = vmatprep.subr.bf16.mxu0 0
  %1358 = vmatpush1.bf16.msra.mxu0 0
  %1359 = vmatprep.subr.bf16.mxu0 0
  %1360 = vmatpush1.bf16.msra.mxu0 0
  %1361 = vmatprep.subr.bf16.mxu0 0
  %1362 = vmatpush1.bf16.msra.mxu0 0
  %1363 = vmatprep.subr.bf16.mxu0 0
  %1364 = vmatpush1.bf16.msra.mxu0 0
  %1365 = vmatprep.subr.bf16.mxu0 0
  %1366 = vmatpush1.bf16.msra.mxu0 0
  %1367 = vmatprep.subr.bf16.mxu0 0
  %1368 = vmatpush1.bf16.msra.mxu0 0
  %1369 = vmatprep.subr.bf16.mxu0 0
  %1370 = vmatpush1.bf16.msra.mxu0 0
  %1371 = vmatprep.subr.bf16.mxu0 0
  %1372 = vmatpush1.bf16.msra.mxu0 0
  %1373 = vmatprep.subr.bf16.mxu0 0
  %1374 = vmatpush1.bf16.msra.mxu0 0
  %1375 = vmatprep.subr.bf16.mxu0 0
  %1376 = vmatpush1.bf16.msra.mxu0 0
  %1377 = vmatprep.subr.bf16.mxu0 0
  %1378 = vmatpush1.bf16.msra.mxu0 0
  %1379 = vmatprep.mubr.bf16.mxu0 0
  %1380 = vmatmul.mubr.bf16.gmra.mrb[0].mxu0 %v1345
  %v1381 = vpop.f32.mrb[0].mxu0
  %v1382 = vadd.f32 0.0, %v1381
  %v1383 = vpop.f32.mrb[0].mxu0
  %v1384 = vpop.f32.mrb[0].mxu0
  %v1385 = vadd.f32 0.0, %v1384
  %v1386 = vpop.f32.mrb[0].mxu0
  %1387 = vdwg.mxu0
  %1390 = vrot.lane.b32.xlu0 %v1382, 16
  %v1391 = vpop.permute.xlu0 %1390
  %1392 = vrot.lane.b32.xlu0 %v1385, 16
  %v1393 = vpop.permute.xlu0 %1392
  %v1396 = vsel %vm331, %v1256, %v1391
  %v1397 = vsel %vm331, %v1259, %v1393
  %s1398 = scalar_lea.vmem %s9, 16
  %v1399 = vld [vmem:[%s1398] sm:$0xf]
  %v1400 = vld [vmem:[%s1398 + $0x4] sm:$0xf]
  %v1401 = vld [vmem:[%s1398 + $0x8] sm:$0xf]
  %v1402 = vld [vmem:[%s1398 + $0xc] sm:$0xf]
  %v1403 = vpack.c.bf16 %v1397, %v1396
  %s1404 = scalar_lea.vmem %s10, 1
  %v1405 = vld [vmem:[%s1404] sm:$0x1]
  %v1407 = vlaneseq
  %v1408 = vshrl.u32 %v1407, 7
  %v1409 = vsub.s32 0, %v1408
  %v1410 = vrot.slane %v1405, %v1409
  %v1416 = vunpack.c.l.b16 %v1399
  %v1417 = vunpack.c.l.b16 %v1400
  %v1418 = vunpack.c.l.b16 %v1401
  %v1419 = vunpack.c.l.b16 %v1402
  %v1420 = vpack.c.b16 %v1417, %v1416
  %v1421 = vpack.c.b16 %v1419, %v1418
  %v1425 = vsel %vm82, %v1403, 0
  %1427 = vmatprep.subr.bf16.mxu0 0
  %1428 = vmatpush1.bf16.msra.mxu0 %v1420
  %1429 = vmatprep.subr.bf16.mxu0 0
  %1430 = vmatpush1.bf16.msra.mxu0 %v1421
  %1431 = vmatprep.subr.bf16.mxu0 0
  %1432 = vmatpush1.bf16.msra.mxu0 0
  %1433 = vmatprep.subr.bf16.mxu0 0
  %1434 = vmatpush1.bf16.msra.mxu0 0
  %1435 = vmatprep.subr.bf16.mxu0 0
  %1436 = vmatpush1.bf16.msra.mxu0 0
  %1437 = vmatprep.subr.bf16.mxu0 0
  %1438 = vmatpush1.bf16.msra.mxu0 0
  %1439 = vmatprep.subr.bf16.mxu0 0
  %1440 = vmatpush1.bf16.msra.mxu0 0
  %1441 = vmatprep.subr.bf16.mxu0 0
  %1442 = vmatpush1.bf16.msra.mxu0 0
  %1443 = vmatprep.subr.bf16.mxu0 0
  %1444 = vmatpush1.bf16.msra.mxu0 0
  %1445 = vmatprep.subr.bf16.mxu0 0
  %1446 = vmatpush1.bf16.msra.mxu0 0
  %1447 = vmatprep.subr.bf16.mxu0 0
  %1448 = vmatpush1.bf16.msra.mxu0 0
  %1449 = vmatprep.subr.bf16.mxu0 0
  %1450 = vmatpush1.bf16.msra.mxu0 0
  %1451 = vmatprep.subr.bf16.mxu0 0
  %1452 = vmatpush1.bf16.msra.mxu0 0
  %1453 = vmatprep.subr.bf16.mxu0 0
  %1454 = vmatpush1.bf16.msra.mxu0 0
  %1455 = vmatprep.subr.bf16.mxu0 0
  %1456 = vmatpush1.bf16.msra.mxu0 0
  %1457 = vmatprep.subr.bf16.mxu0 0
  %1458 = vmatpush1.bf16.msra.mxu0 0
  %1459 = vmatprep.mubr.bf16.mxu0 0
  %1460 = vmatmul.mubr.bf16.gmra.mrb[0].mxu0 %v1425
  %v1461 = vpop.f32.mrb[0].mxu0
  %v1462 = vadd.f32 %v1410, %v1461
  %v1463 = vpop.f32.mrb[0].mxu0
  %v1464 = vpop.f32.mrb[0].mxu0
  %v1465 = vadd.f32 %v1410, %v1464
  %v1466 = vpop.f32.mrb[0].mxu0
  %1467 = vdwg.mxu0
  %v1468 = vmul.f32 %v952, 2.0
  %v1469 = vmul.f32 %v953, 2.0
  %v1470 = vadd.f32 %v1468, %v1462
  %v1471 = vadd.f32 %v1469, %v1465
  %s1472 = scalar_lea.vmem %s11, 1
  %v1473 = vld [vmem:[%s1472] sm:$0x1]
  %s1474 = scalar_lea.vmem %s12, 1
  %v1475 = vld [vmem:[%s1474] sm:$0x1]
  %v1476 = vsel %vm82, %v1470, 0.0
  %1477 = vadd.xlane.f32.xlu0 %v1476
  %v1478 = vpop.xlane.xlu0 %1477
  %v1479 = vsel %vm82, %v1471, 0.0
  %1480 = vadd.xlane.f32.xlu0 %v1479
  %v1481 = vpop.xlane.xlu0 %1480
  %v1482 = vmul.f32 %v1478, %v89
  %v1483 = vmul.f32 %v1481, %v89
  %v1484 = vsub.f32 %v1470, %v1482
  %v1485 = vsub.f32 %v1471, %v1483
  %v1486 = vmul.f32 %v1484, %v1484
  %v1487 = vmul.f32 %v1485, %v1485
  %v1488 = vsel %vm82, %v1486, 0.0
  %1489 = vadd.xlane.f32.xlu0 %v1488
  %v1490 = vpop.xlane.xlu0 %1489
  %v1491 = vsel %vm82, %v1487, 0.0
  %1492 = vadd.xlane.f32.xlu0 %v1491
  %v1493 = vpop.xlane.xlu0 %1492
  %v1494 = vmul.f32 %v1490, %v89
  %v1495 = vmul.f32 %v1493, %v89
  %v1496 = vadd.f32 %v1494, 1e-05
  %v1497 = vadd.f32 %v1495, 1e-05
  %v1498 = vrsqrt.pop %v1496
  %v1499 = vrsqrt.pop %v1497
  %v1500 = vmul.f32 %v1484, %v1498
  %v1501 = vmul.f32 %v1485, %v1499
  %v1503 = vlaneseq
  %v1504 = vshrl.u32 %v1503, 7
  %v1505 = vsub.s32 0, %v1504
  %v1506 = vrot.slane %v1473, %v1505
  %v1508 = vmul.f32 %v1500, %v1506
  %v1509 = vmul.f32 %v1501, %v1506
  %v1511 = vlaneseq
  %v1512 = vshrl.u32 %v1511, 7
  %v1513 = vsub.s32 0, %v1512
  %v1514 = vrot.slane %v1475, %v1513
  %v1516 = vadd.f32 %v1508, %v1514
  %v1517 = vadd.f32 %v1509, %v1514
  %s1518 = scalar_lea.vmem %s13, 16
  %v1519 = vld [vmem:[%s1518] sm:$0xf]
  %v1520 = vld [vmem:[%s1518 + $0x4] sm:$0xf]
  %v1521 = vld [vmem:[%s1518 + $0x8] sm:$0xf]
  %v1522 = vld [vmem:[%s1518 + $0xc] sm:$0xf]
  %v1523 = vpack.c.bf16 %v1517, %v1516
  %s1524 = scalar_lea.vmem %s14, 1
  %v1525 = vld [vmem:[%s1524] sm:$0x1]
  %v1527 = vlaneseq
  %v1528 = vshrl.u32 %v1527, 7
  %v1529 = vsub.s32 0, %v1528
  %v1530 = vrot.slane %v1525, %v1529
  %v1536 = vunpack.c.l.b16 %v1519
  %v1537 = vunpack.c.l.b16 %v1520
  %v1538 = vunpack.c.l.b16 %v1521
  %v1539 = vunpack.c.l.b16 %v1522
  %v1540 = vpack.c.b16 %v1537, %v1536
  %v1541 = vpack.c.b16 %v1539, %v1538
  %v1545 = vsel %vm82, %v1523, 0
  %1547 = vmatprep.subr.bf16.mxu0 0
  %1548 = vmatpush1.bf16.msra.mxu0 %v1540
  %1549 = vmatprep.subr.bf16.mxu0 0
  %1550 = vmatpush1.bf16.msra.mxu0 %v1541
  %1551 = vmatprep.subr.bf16.mxu0 0
  %1552 = vmatpush1.bf16.msra.mxu0 0
  %1553 = vmatprep.subr.bf16.mxu0 0
  %1554 = vmatpush1.bf16.msra.mxu0 0
  %1555 = vmatprep.subr.bf16.mxu0 0
  %1556 = vmatpush1.bf16.msra.mxu0 0
  %1557 = vmatprep.subr.bf16.mxu0 0
  %1558 = vmatpush1.bf16.msra.mxu0 0
  %1559 = vmatprep.subr.bf16.mxu0 0
  %1560 = vmatpush1.bf16.msra.mxu0 0
  %1561 = vmatprep.subr.bf16.mxu0 0
  %1562 = vmatpush1.bf16.msra.mxu0 0
  %1563 = vmatprep.subr.bf16.mxu0 0
  %1564 = vmatpush1.bf16.msra.mxu0 0
  %1565 = vmatprep.subr.bf16.mxu0 0
  %1566 = vmatpush1.bf16.msra.mxu0 0
  %1567 = vmatprep.subr.bf16.mxu0 0
  %1568 = vmatpush1.bf16.msra.mxu0 0
  %1569 = vmatprep.subr.bf16.mxu0 0
  %1570 = vmatpush1.bf16.msra.mxu0 0
  %1571 = vmatprep.subr.bf16.mxu0 0
  %1572 = vmatpush1.bf16.msra.mxu0 0
  %1573 = vmatprep.subr.bf16.mxu0 0
  %1574 = vmatpush1.bf16.msra.mxu0 0
  %1575 = vmatprep.subr.bf16.mxu0 0
  %1576 = vmatpush1.bf16.msra.mxu0 0
  %1577 = vmatprep.subr.bf16.mxu0 0
  %1578 = vmatpush1.bf16.msra.mxu0 0
  %1579 = vmatprep.mubr.bf16.mxu0 0
  %1580 = vmatmul.mubr.bf16.gmra.mrb[0].mxu0 %v1545
  %v1581 = vpop.f32.mrb[0].mxu0
  %v1582 = vadd.f32 %v1530, %v1581
  %v1583 = vpop.f32.mrb[0].mxu0
  %v1584 = vpop.f32.mrb[0].mxu0
  %v1585 = vadd.f32 %v1530, %v1584
  %v1586 = vpop.f32.mrb[0].mxu0
  %1587 = vdwg.mxu0
  %v1588 = vmul.f32 %v1582, 0.5
  %v1589 = vmul.f32 %v1585, 0.5
  %v1590 = vmul.f32 %v1582, 0.7978846
  %v1591 = vmul.f32 %v1585, 0.7978846
  %v1592 = vmul.f32 %v1582, 0.044715
  %v1593 = vmul.f32 %v1585, 0.044715
  %v1594 = vmul.f32 %v1592, %v1582
  %v1595 = vmul.f32 %v1593, %v1585
  %v1596 = vadd.f32 %v1594, 1.0
  %v1597 = vadd.f32 %v1595, 1.0
  %v1598 = vmul.f32 %v1590, %v1596
  %v1599 = vmul.f32 %v1591, %v1597
  %v1600 = vtanh.pop %v1598
  %v1601 = vtanh.pop %v1599
  %v1602 = vadd.f32 %v1600, 1.0
  %v1603 = vadd.f32 %v1601, 1.0
  %v1604 = vmul.f32 %v1588, %v1602
  %v1605 = vmul.f32 %v1589, %v1603
  %s1606 = scalar_lea.vmem %s15, 64
  %v1607 = vld [vmem:[%s1606] sm:$0xf]
  %v1608 = vld [vmem:[%s1606 + $0x4] sm:$0xf]
  %v1609 = vld [vmem:[%s1606 + $0x8] sm:$0xf]
  %v1610 = vld [vmem:[%s1606 + $0xc] sm:$0xf]
  %v1611 = vld [vmem:[%s1606 + $0x10] sm:$0xf]
  %v1612 = vld [vmem:[%s1606 + $0x14] sm:$0xf]
  %v1613 = vld [vmem:[%s1606 + $0x18] sm:$0xf]
  %v1614 = vld [vmem:[%s1606 + $0x1c] sm:$0xf]
  %v1615 = vld [vmem:[%s1606 + $0x20] sm:$0xf]
  %v1616 = vld [vmem:[%s1606 + $0x24] sm:$0xf]
  %v1617 = vld [vmem:[%s1606 + $0x28] sm:$0xf]
  %v1618 = vld [vmem:[%s1606 + $0x2c] sm:$0xf]
  %v1619 = vld [vmem:[%s1606 + $0x30] sm:$0xf]
  %v1620 = vld [vmem:[%s1606 + $0x34] sm:$0xf]
  %v1621 = vld [vmem:[%s1606 + $0x38] sm:$0xf]
  %v1622 = vld [vmem:[%s1606 + $0x3c] sm:$0xf]
  %v1623 = vpack.c.bf16 %v1605, %v1604
  %s1624 = scalar_lea.vmem %s16, 1
  %v1625 = vld [vmem:[%s1624] sm:$0x1]
  %v1627 = vlaneseq
  %v1628 = vshrl.u32 %v1627, 7
  %v1629 = vsub.s32 0, %v1628
  %v1630 = vrot.slane %v1625, %v1629
  %v1648 = vunpack.c.l.b16 %v1607
  %v1649 = vunpack.c.l.b16 %v1608
  %v1650 = vunpack.c.l.b16 %v1609
  %v1651 = vunpack.c.l.b16 %v1610
  %v1652 = vunpack.c.l.b16 %v1611
  %v1653 = vunpack.c.l.b16 %v1612
  %v1654 = vunpack.c.l.b16 %v1613
  %v1655 = vunpack.c.l.b16 %v1614
  %v1656 = vunpack.c.l.b16 %v1615
  %v1657 = vunpack.c.l.b16 %v1616
  %v1658 = vunpack.c.l.b16 %v1617
  %v1659 = vunpack.c.l.b16 %v1618
  %v1660 = vunpack.c.l.b16 %v1619
  %v1661 = vunpack.c.l.b16 %v1620
  %v1662 = vunpack.c.l.b16 %v1621
  %v1663 = vunpack.c.l.b16 %v1622
  %v1664 = vpack.c.b16 %v1649, %v1648
  %v1665 = vpack.c.b16 %v1651, %v1650
  %v1666 = vpack.c.b16 %v1653, %v1652
  %v1667 = vpack.c.b16 %v1655, %v1654
  %v1668 = vpack.c.b16 %v1657, %v1656
  %v1669 = vpack.c.b16 %v1659, %v1658
  %v1670 = vpack.c.b16 %v1661, %v1660
  %v1671 = vpack.c.b16 %v1663, %v1662
  %1680 = vmatprep.subr.bf16.mxu0 0
  %1681 = vmatpush1.bf16.msra.mxu0 %v1664
  %1682 = vmatprep.subr.bf16.mxu0 0
  %1683 = vmatpush1.bf16.msra.mxu0 %v1665
  %1684 = vmatprep.subr.bf16.mxu0 0
  %1685 = vmatpush1.bf16.msra.mxu0 %v1666
  %1686 = vmatprep.subr.bf16.mxu0 0
  %1687 = vmatpush1.bf16.msra.mxu0 %v1667
  %1688 = vmatprep.subr.bf16.mxu0 0
  %1689 = vmatpush1.bf16.msra.mxu0 %v1668
  %1690 = vmatprep.subr.bf16.mxu0 0
  %1691 = vmatpush1.bf16.msra.mxu0 %v1669
  %1692 = vmatprep.subr.bf16.mxu0 0
  %1693 = vmatpush1.bf16.msra.mxu0 %v1670
  %1694 = vmatprep.subr.bf16.mxu0 0
  %1695 = vmatpush1.bf16.msra.mxu0 %v1671
  %1696 = vmatprep.subr.bf16.mxu0 0
  %1697 = vmatpush1.bf16.msra.mxu0 0
  %1698 = vmatprep.subr.bf16.mxu0 0
  %1699 = vmatpush1.bf16.msra.mxu0 0
  %1700 = vmatprep.subr.bf16.mxu0 0
  %1701 = vmatpush1.bf16.msra.mxu0 0
  %1702 = vmatprep.subr.bf16.mxu0 0
  %1703 = vmatpush1.bf16.msra.mxu0 0
  %1704 = vmatprep.subr.bf16.mxu0 0
  %1705 = vmatpush1.bf16.msra.mxu0 0
  %1706 = vmatprep.subr.bf16.mxu0 0
  %1707 = vmatpush1.bf16.msra.mxu0 0
  %1708 = vmatprep.subr.bf16.mxu0 0
  %1709 = vmatpush1.bf16.msra.mxu0 0
  %1710 = vmatprep.subr.bf16.mxu0 0
  %1711 = vmatpush1.bf16.msra.mxu0 0
  %1712 = vmatprep.mubr.bf16.mxu0 0
  %1713 = vmatmul.mubr.bf16.gmra.mrb[0].mxu0 %v1623
  %v1714 = vpop.f32.mrb[0].mxu0
  %v1715 = vadd.f32 %v1630, %v1714
  %v1716 = vpop.f32.mrb[0].mxu0
  %v1717 = vpop.f32.mrb[0].mxu0
  %v1718 = vadd.f32 %v1630, %v1717
  %v1719 = vpop.f32.mrb[0].mxu0
  %1720 = vdwg.mxu0
  %v1721 = vmul.f32 %v1516, 2.0
  %v1722 = vmul.f32 %v1517, 2.0
  %v1723 = vadd.f32 %v1721, %v1715
  %v1724 = vadd.f32 %v1722, %v1718
  %v1725 = vld [vmem:[%s17] sm:$0x1]
  %v1726 = vld [vmem:[%s18] sm:$0x1]
  %v1727 = vsel %vm82, %v1723, 0.0
  %1728 = vadd.xlane.f32.xlu0 %v1727
  %v1729 = vpop.xlane.xlu0 %1728
  %v1730 = vsel %vm82, %v1724, 0.0
  %1731 = vadd.xlane.f32.xlu0 %v1730
  %v1732 = vpop.xlane.xlu0 %1731
  %v1733 = vmul.f32 %v1729, %v89
  %v1734 = vmul.f32 %v1732, %v89
  %v1735 = vsub.f32 %v1723, %v1733
  %v1736 = vsub.f32 %v1724, %v1734
  %v1737 = vmul.f32 %v1735, %v1735
  %v1738 = vmul.f32 %v1736, %v1736
  %v1739 = vsel %vm82, %v1737, 0.0
  %1740 = vadd.xlane.f32.xlu0 %v1739
  %v1741 = vpop.xlane.xlu0 %1740
  %v1742 = vsel %vm82, %v1738, 0.0
  %1743 = vadd.xlane.f32.xlu0 %v1742
  %v1744 = vpop.xlane.xlu0 %1743
  %v1745 = vmul.f32 %v1741, %v89
  %v1746 = vmul.f32 %v1744, %v89
  %v1747 = vadd.f32 %v1745, 1e-05
  %v1748 = vadd.f32 %v1746, 1e-05
  %v1749 = vrsqrt.pop %v1747
  %v1750 = vrsqrt.pop %v1748
  %v1751 = vmul.f32 %v1735, %v1749
  %v1752 = vmul.f32 %v1736, %v1750
  %v1754 = vlaneseq
  %v1755 = vshrl.u32 %v1754, 7
  %v1756 = vsub.s32 0, %v1755
  %v1757 = vrot.slane %v1725, %v1756
  %v1759 = vmul.f32 %v1751, %v1757
  %v1760 = vmul.f32 %v1752, %v1757
  %v1762 = vlaneseq
  %v1763 = vshrl.u32 %v1762, 7
  %v1764 = vsub.s32 0, %v1763
  %v1765 = vrot.slane %v1726, %v1764
  %v1767 = vadd.f32 %v1759, %v1765
  %v1768 = vadd.f32 %v1760, %v1765
  %v1769 = vld [vmem:[%s19] sm:$0xf]
  %v1770 = vld [vmem:[%s19 + $0x4] sm:$0xf]
  %v1771 = vld [vmem:[%s19 + $0x8] sm:$0xf]
  %v1772 = vld [vmem:[%s19 + $0xc] sm:$0xf]
  %v1773 = vpack.c.bf16 %v1768, %v1767
  %v1778 = vunpack.c.l.b16 %v1769
  %v1779 = vunpack.c.l.b16 %v1770
  %v1780 = vunpack.c.l.b16 %v1771
  %v1781 = vunpack.c.l.b16 %v1772
  %v1782 = vpack.c.b16 %v1779, %v1778
  %v1783 = vpack.c.b16 %v1781, %v1780
  %v1787 = vsel %vm82, %v1773, 0
  %1789 = vmatprep.subr.bf16.mxu0 0
  %1790 = vmatpush1.bf16.msra.mxu0 %v1782
  %1791 = vmatprep.subr.bf16.mxu0 0
  %1792 = vmatpush1.bf16.msra.mxu0 %v1783
  %1793 = vmatprep.subr.bf16.mxu0 0
  %1794 = vmatpush1.bf16.msra.mxu0 0
  %1795 = vmatprep.subr.bf16.mxu0 0
  %1796 = vmatpush1.bf16.msra.mxu0 0
  %1797 = vmatprep.subr.bf16.mxu0 0
  %1798 = vmatpush1.bf16.msra.mxu0 0
  %1799 = vmatprep.subr.bf16.mxu0 0
  %1800 = vmatpush1.bf16.msra.mxu0 0
  %1801 = vmatprep.subr.bf16.mxu0 0
  %1802 = vmatpush1.bf16.msra.mxu0 0
  %1803 = vmatprep.subr.bf16.mxu0 0
  %1804 = vmatpush1.bf16.msra.mxu0 0
  %1805 = vmatprep.subr.bf16.mxu0 0
  %1806 = vmatpush1.bf16.msra.mxu0 0
  %1807 = vmatprep.subr.bf16.mxu0 0
  %1808 = vmatpush1.bf16.msra.mxu0 0
  %1809 = vmatprep.subr.bf16.mxu0 0
  %1810 = vmatpush1.bf16.msra.mxu0 0
  %1811 = vmatprep.subr.bf16.mxu0 0
  %1812 = vmatpush1.bf16.msra.mxu0 0
  %1813 = vmatprep.subr.bf16.mxu0 0
  %1814 = vmatpush1.bf16.msra.mxu0 0
  %1815 = vmatprep.subr.bf16.mxu0 0
  %1816 = vmatpush1.bf16.msra.mxu0 0
  %1817 = vmatprep.subr.bf16.mxu0 0
  %1818 = vmatpush1.bf16.msra.mxu0 0
  %1819 = vmatprep.subr.bf16.mxu0 0
  %1820 = vmatpush1.bf16.msra.mxu0 0
  %1821 = vmatprep.mubr.bf16.mxu0 0
  %1822 = vmatmul.mubr.bf16.gmra.mrb[0].mxu0 %v1787
  %v1823 = vpop.f32.mrb[0].mxu0
  %v1824 = vadd.f32 0.0, %v1823
  %v1825 = vpop.f32.mrb[0].mxu0
  %v1826 = vpop.f32.mrb[0].mxu0
  %v1827 = vadd.f32 0.0, %v1826
  %v1828 = vpop.f32.mrb[0].mxu0
  %1829 = vdwg.mxu0
  %1830 = vst [vmem:[%s20] sm:$0xff] %v1824
  %1831 = vst [vmem:[%s20 + $0x8] sm:$0xff] %v1827
  %1834 = vrot.lane.b32.xlu0 %v324, 96
  %v1835 = vpop.permute.xlu0 %1834
  %1836 = vrot.lane.b32.xlu0 %v325, 96
  %v1837 = vpop.permute.xlu0 %1836
  %1842 = vrot.lane.b32.xlu0 %v188, 96
  %v1843 = vpop.permute.xlu0 %1842
  %1844 = vrot.lane.b32.xlu0 %v191, 96
  %v1845 = vpop.permute.xlu0 %1844
  %1850 = vrot.lane.b32.xlu0 %v1134, 32
  %v1851 = vpop.permute.xlu0 %1850
  %1852 = vrot.lane.b32.xlu0 %v1135, 32
  %v1853 = vpop.permute.xlu0 %1852
  %1858 = vrot.lane.b32.xlu0 %v1018, 32
  %v1859 = vpop.permute.xlu0 %1858
  %1860 = vrot.lane.b32.xlu0 %v1021, 32
  %v1861 = vpop.permute.xlu0 %1860
  %v1864 = vsel %vm82, %v1835, %v1843
  %v1865 = vsel %vm82, %v1837, %v1845
  %vm1866 = vcmask 523264
  %v1867 = vsel %vm1866, %v1864, %v1851
  %v1868 = vsel %vm1866, %v1865, %v1853
  %vm1869 = vcmask 785408
  %v1870 = vsel %vm1869, %v1867, %v1859
  %v1871 = vsel %vm1869, %v1868, %v1861
  %1872 = vst [vmem:[%s21] sm:$0xff] %v1870
  %1873 = vst [vmem:[%s21 + $0x8] sm:$0xff] %v1871
  // Predicated region
  $region82: #{chatmodel_forward.1} parent=0 // pred_check
    _
  $region83: #{chatmodel_forward.1} parent=0 // pred_check_branch
    %1875 = sbr.rel (0) target = $region85
  $region84: #{chatmodel_forward.1} parent=0 // pred_region
    _
  $region85: #{chatmodel_forward.1} parent=0 // pred_fallthru
    _
  // Predicated region
  $region86: #{chatmodel_forward.1} parent=0 // pred_check
    _
  $region87: #{chatmodel_forward.1} parent=0 // pred_check_branch
    %1877 = sbr.rel (0) target = $region89
  $region88: #{chatmodel_forward.1} parent=0 // pred_region
    _
  $region89: #{chatmodel_forward.1} parent=0 // pred_fallthru
    _
  // Predicated region
  $region90: #{chatmodel_forward.1} parent=0 // pred_check
    _
  $region91: #{chatmodel_forward.1} parent=0 // pred_check_branch
    %1879 = sbr.rel (0) target = $region93
  $region92: #{chatmodel_forward.1} parent=0 // pred_region
    _
  $region93: #{chatmodel_forward.1} parent=0 // pred_fallthru
    _
  // Predicated region
  $region94: #{chatmodel_forward.1} parent=0 // pred_check
    _
  $region95: #{chatmodel_forward.1} parent=0 // pred_check_branch
    %1881 = sbr.rel (0) target = $region97
  $region96: #{chatmodel_forward.1} parent=0 // pred_region
    _
  $region97: #{chatmodel_forward.1} parent=0 // pred_fallthru
    _

</llo_original>
